<compile_context>
chip_gen: v6e
topology: v6e:2x2x1
jax: 0.10.0
libtpu: 0.0.40
codegen_flags: <defaults>
</compile_context>

<pallas_src>
import numpy as np
import jax
import jax.numpy as jnp
from jax.experimental import pallas as pl
from jax.experimental.pallas import tpu as pltpu


# -----------------------------------------------------------------------------
# Kernel
# -----------------------------------------------------------------------------
def nic_kernel(ids_ref, img_ref, wimg_ref, bimg_ref, emb_ref,
               wih_ref, bg_ref, whh_ref, wlog_ref, blog_ref, out_ref):
    # ids_ref : ((T-1)*B, 1) int32 token ids (time-major), VMEM
    # out_ref : (T*B, V1) time-major log-probs, VMEM
    TB, V1 = out_ref.shape
    B = img_ref.shape[0]
    T = TB // B
    R = whh_ref.shape[0]

    # ---- t == 0 rows: image embedding, computed exactly once ---------------
    img_x = (jnp.dot(img_ref[...], wimg_ref[...],
                     preferred_element_type=jnp.float32) + bimg_ref[...])

    # ---- t >= 1 rows: vectorized embedding lookup via one-hot @ emb --------
    if T > 1:
        ids = ids_ref[...]                                   # ((T-1)*B, 1)
        iota = jax.lax.broadcasted_iota(jnp.int32, (ids.shape[0], V1), 1)
        onehot = (iota == ids).astype(jnp.float32)           # ((T-1)*B, V1)
        emb_x = jnp.dot(onehot, emb_ref[...],
                        preferred_element_type=jnp.float32)  # ((T-1)*B, E)
        x = jnp.concatenate([img_x, emb_x], axis=0)          # (T*B, E)
    else:
        x = img_x

    # ---- hoisted, batched input projection: one (T*B,E)@(E,4R) matmul ------
    # bias = b_ih + b_hh folded in the wrapper; gate columns permuted (i,f,o,g)
    pre = (jnp.dot(x, wih_ref[...], preferred_element_type=jnp.float32)
           + bg_ref[...])                                    # (T*B, 4R)

    # ---- sequential LSTM recurrence (permuted gate order: i, f, o, g) ------
    h = jnp.zeros((B, R), jnp.float32)
    c = jnp.zeros((B, R), jnp.float32)
    hs = []
    for t in range(T):
        gates = pre[t * B:(t + 1) * B, :] + jnp.dot(
            h, whh_ref[...], preferred_element_type=jnp.float32)
        sig = jax.nn.sigmoid(gates[:, :3 * R])               # one EUP slab
        g_g = jnp.tanh(gates[:, 3 * R:])
        i_g = sig[:, 0 * R:1 * R]
        f_g = sig[:, 1 * R:2 * R]
        o_g = sig[:, 2 * R:3 * R]
        c = f_g * c + i_g * g_g
        h = o_g * jnp.tanh(c)
        hs.append(h)
    hidden = jnp.concatenate(hs, axis=0)                     # (T*B, R)

    # ---- deferred, batched logit projection + stable log_softmax -----------
    logits = (jnp.dot(hidden, wlog_ref[...],
                      preferred_element_type=jnp.float32) + blog_ref[...])
    m = jnp.max(logits, axis=-1, keepdims=True)
    lse = jnp.log(jnp.sum(jnp.exp(logits - m), axis=-1, keepdims=True)) + m

    # ---- single dense (T*B, V1) store --------------------------------------
    out_ref[...] = logits - lse


# -----------------------------------------------------------------------------
# Wrapper
# -----------------------------------------------------------------------------
def _permute_gates(w):
    """Reorder last-axis gate blocks from PyTorch (i,f,g,o) to (i,f,o,g)."""
    i, f, g, o = jnp.split(w, 4, axis=-1)
    return jnp.concatenate([i, f, o, g], axis=-1)


def nic_forward(params, img_feat, seq):
    """params: dict of weight arrays (math layout, i.e. x @ W + b).
    img_feat: (B, feat_size) f32.  seq: (B, T) int32.  Returns (B, T_eff, V+1)."""
    W_img, b_img = params["W_img"], params["b_img"]
    emb = params["emb"]
    W_ih, b_ih = params["W_ih"], params["b_ih"]
    W_hh, b_hh = params["W_hh"], params["b_hh"]
    W_log, b_log = params["W_log"], params["b_log"]

    seq_np = np.asarray(seq)
    B, T_full = seq_np.shape
    V1 = emb.shape[0]            # vocab_size + 1
    E = emb.shape[1]             # input_size
    R = W_hh.shape[0]            # rnn_size

    # Early-break semantics of the PyTorch loop (changes the output length).
    T = T_full
    for i in range(1, T_full):
        if seq_np[:, i].sum() == 0:
            T = i
            break

    # Token ids for steps 1..T-1, time-major, as a small VMEM int32 column.
    if T > 1:
        ids = jnp.asarray(seq_np[:, 1:T].T.reshape(-1, 1), dtype=jnp.int32)
    else:
        ids = jnp.zeros((B, 1), dtype=jnp.int32)             # unused dummy

    # Fold both LSTM biases and permute gate columns to (i, f, o, g).
    W_ih_p = _permute_gates(W_ih)
    W_hh_p = _permute_gates(W_hh)
    b_gates = _permute_gates(b_ih + b_hh)

    vmem = pl.BlockSpec(memory_space=pltpu.MemorySpace.VMEM)

    def nbytes(a):
        return int(np.prod(a.shape)) * a.dtype.itemsize

    inputs = (ids, img_feat, W_img, b_img, emb, W_ih_p, b_gates, W_hh_p,
              W_log, b_log)
    out_bytes = T * B * V1 * 4
    resident = sum(nbytes(a) for a in inputs) + out_bytes \
        + 4 * (T * B * (E + 4 * R + R + V1))                 # intermediates
    vmem_limit = int(min(100 * 2**20, max(8 * 2**20, 8 * resident)))

    feat = img_feat.shape[1]
    flops = 2 * (B * feat * E                     # image projection
                 + max(T - 1, 0) * B * V1 * E     # one-hot embedding matmul
                 + T * B * E * 4 * R              # batched W_ih
                 + T * B * R * 4 * R              # per-step W_hh
                 + T * B * R * V1)                # logit projection
    transcendentals = T * B * (5 * R + V1 + 1)    # sigmoids/tanh/exp/log
    bytes_accessed = sum(nbytes(a) for a in inputs) + out_bytes

    out_tm = pl.pallas_call(
        nic_kernel,
        out_shape=jax.ShapeDtypeStruct((T * B, V1), jnp.float32),
        in_specs=[vmem] * len(inputs),
        out_specs=vmem,
        compiler_params=pltpu.CompilerParams(vmem_limit_bytes=vmem_limit),
        cost_estimate=pl.CostEstimate(flops=flops,
                                      transcendentals=transcendentals,
                                      bytes_accessed=bytes_accessed),
    )(*inputs)

    # Cheap XLA relayout to (B, T, V1) outside the kernel.
    return jnp.transpose(out_tm.reshape(T, B, V1), (1, 0, 2))


# -----------------------------------------------------------------------------
# Pure-JAX reference (for correctness check)
# -----------------------------------------------------------------------------
def nic_reference(params, img_feat, seq, T):
    W_img, b_img = params["W_img"], params["b_img"]
    emb = params["emb"]
    W_ih, b_ih = params["W_ih"], params["b_ih"]
    W_hh, b_hh = params["W_hh"], params["b_hh"]
    W_log, b_log = params["W_log"], params["b_log"]
    B = img_feat.shape[0]
    R = W_hh.shape[0]
    h = jnp.zeros((B, R), jnp.float32)
    c = jnp.zeros((B, R), jnp.float32)
    outs = []
    for i in range(T):
        if i == 0:
            x = img_feat @ W_img + b_img
        else:
            x = emb[seq[:, i]]
        gates = x @ W_ih + b_ih + h @ W_hh + b_hh
        i_g = jax.nn.sigmoid(gates[:, :R])
        f_g = jax.nn.sigmoid(gates[:, R:2 * R])
        g_g = jnp.tanh(gates[:, 2 * R:3 * R])
        o_g = jax.nn.sigmoid(gates[:, 3 * R:])
        c = f_g * c + i_g * g_g
        h = o_g * jnp.tanh(c)
        outs.append(jax.nn.log_softmax(h @ W_log + b_log, axis=1))
    return jnp.stack(outs, axis=1)


# -----------------------------------------------------------------------------
# Main
# -----------------------------------------------------------------------------
if __name__ == "__main__":
    # small opt: vocab_size=31 (V+1=32), input_size=32, rnn_size=32,
    # feat_size=64, num_layers=1 (LSTMCell => single layer), batch=8, seq=8
    vocab_size, input_size, rnn_size, feat_size = 31, 32, 32, 64
    B, T = 8, 8
    V1 = vocab_size + 1

    key = jax.random.PRNGKey(0)
    ks = jax.random.split(key, 12)
    s = 0.1
    params = {
        "W_img": s * jax.random.normal(ks[0], (feat_size, input_size), jnp.float32),
        "b_img": s * jax.random.normal(ks[1], (1, input_size), jnp.float32),
        "emb":   s * jax.random.normal(ks[2], (V1, input_size), jnp.float32),
        "W_ih":  s * jax.random.normal(ks[3], (input_size, 4 * rnn_size), jnp.float32),
        "b_ih":  s * jax.random.normal(ks[4], (1, 4 * rnn_size), jnp.float32),
        "W_hh":  s * jax.random.normal(ks[5], (rnn_size, 4 * rnn_size), jnp.float32),
        "b_hh":  s * jax.random.normal(ks[6], (1, 4 * rnn_size), jnp.float32),
        "W_log": s * jax.random.normal(ks[7], (rnn_size, V1), jnp.float32),
        "b_log": s * jax.random.normal(ks[8], (1, V1), jnp.float32),
    }

    img_feat = jax.random.normal(ks[9], (B, feat_size), jnp.float32)
    # tokens in [1, vocab_size] so no column triggers the early break
    seq = jax.random.randint(ks[10], (B, T), 1, vocab_size + 1, jnp.int32)

    out = nic_forward(params, img_feat, seq)
    out = jax.block_until_ready(out)

    ref = nic_reference(params, img_feat, np.asarray(seq), out.shape[1])
    np.testing.assert_allclose(np.asarray(out), np.asarray(ref),
                               rtol=2e-5, atol=2e-5)

    print("KERNEL_OK")
</pallas_src>

<mosaic_0001>
module attributes {stable_mosaic.version = 11 : i64} {
  func.func @nic_kernel(%arg0: memref<56x1xi32, #tpu.memory_space<vmem>>, %arg1: memref<8x64xf32, #tpu.memory_space<vmem>>, %arg2: memref<64x32xf32, #tpu.memory_space<vmem>>, %arg3: memref<1x32xf32, #tpu.memory_space<vmem>>, %arg4: memref<32x32xf32, #tpu.memory_space<vmem>>, %arg5: memref<32x128xf32, #tpu.memory_space<vmem>>, %arg6: memref<1x128xf32, #tpu.memory_space<vmem>>, %arg7: memref<32x128xf32, #tpu.memory_space<vmem>>, %arg8: memref<32x32xf32, #tpu.memory_space<vmem>>, %arg9: memref<1x32xf32, #tpu.memory_space<vmem>>, %arg10: memref<64x32xf32, #tpu.memory_space<vmem>>) attributes {dimension_semantics = [], scalar_prefetch = 0 : i64, scratch_operands = 0 : i64, tpu.core_type = #tpu.core_type<tc>} {
    %c0 = arith.constant 0 : index
    %c0_0 = arith.constant 0 : index
    %0 = vector.load %arg1[%c0, %c0_0] : memref<8x64xf32, #tpu.memory_space<vmem>>, vector<8x64xf32>
    %c0_1 = arith.constant 0 : index
    %c0_2 = arith.constant 0 : index
    %1 = vector.load %arg2[%c0_1, %c0_2] : memref<64x32xf32, #tpu.memory_space<vmem>>, vector<64x32xf32>
    %cst = arith.constant dense<0.000000e+00> : vector<8x32xf32>
    %2 = tpu.matmul %0, %1, %cst {dimension_numbers = #tpu.dot_dimension_numbers<[1], [0], [0], [1], [0, 0, 1, 1], [], []>} : vector<8x64xf32>, vector<64x32xf32>, vector<8x32xf32> -> vector<8x32xf32>
    %c0_3 = arith.constant 0 : index
    %c0_4 = arith.constant 0 : index
    %3 = vector.load %arg3[%c0_3, %c0_4] : memref<1x32xf32, #tpu.memory_space<vmem>>, vector<1x32xf32>
    %4 = vector.broadcast %3 : vector<1x32xf32> to vector<8x32xf32>
    %5 = arith.addf %2, %4 : vector<8x32xf32>
    %c0_5 = arith.constant 0 : index
    %c0_6 = arith.constant 0 : index
    %6 = vector.load %arg0[%c0_5, %c0_6] : memref<56x1xi32, #tpu.memory_space<vmem>>, vector<56x1xi32>
    %7 = tpu.iota {dimensions = array<i32: 1>} : vector<56x32xi32>
    %8 = vector.broadcast %6 : vector<56x1xi32> to vector<56x32xi32>
    %9 = arith.cmpi eq, %7, %8 : vector<56x32xi32>
    %10 = arith.extui %9 : vector<56x32xi1> to vector<56x32xi32>
    %11 = arith.sitofp %10 : vector<56x32xi32> to vector<56x32xf32>
    %c0_7 = arith.constant 0 : index
    %c0_8 = arith.constant 0 : index
    %12 = vector.load %arg4[%c0_7, %c0_8] : memref<32x32xf32, #tpu.memory_space<vmem>>, vector<32x32xf32>
    %cst_9 = arith.constant dense<0.000000e+00> : vector<56x32xf32>
    %13 = tpu.matmul %11, %12, %cst_9 {dimension_numbers = #tpu.dot_dimension_numbers<[1], [0], [0], [1], [0, 0, 1, 1], [], []>} : vector<56x32xf32>, vector<32x32xf32>, vector<56x32xf32> -> vector<56x32xf32>
    %14 = tpu.concatenate %5, %13 in 0 : vector<8x32xf32>, vector<56x32xf32> -> vector<64x32xf32>
    %c0_10 = arith.constant 0 : index
    %c0_11 = arith.constant 0 : index
    %15 = vector.load %arg5[%c0_10, %c0_11] : memref<32x128xf32, #tpu.memory_space<vmem>>, vector<32x128xf32>
    %cst_12 = arith.constant dense<0.000000e+00> : vector<64x128xf32>
    %16 = tpu.matmul %14, %15, %cst_12 {dimension_numbers = #tpu.dot_dimension_numbers<[1], [0], [0], [1], [0, 0, 1, 1], [], []>} : vector<64x32xf32>, vector<32x128xf32>, vector<64x128xf32> -> vector<64x128xf32>
    %c0_13 = arith.constant 0 : index
    %c0_14 = arith.constant 0 : index
    %17 = vector.load %arg6[%c0_13, %c0_14] : memref<1x128xf32, #tpu.memory_space<vmem>>, vector<1x128xf32>
    %18 = vector.broadcast %17 : vector<1x128xf32> to vector<64x128xf32>
    %19 = arith.addf %16, %18 : vector<64x128xf32>
    %cst_15 = arith.constant 0.000000e+00 : f32
    %20 = vector.broadcast %cst_15 : f32 to vector<8x32xf32>
    %cst_16 = arith.constant 0.000000e+00 : f32
    %21 = vector.broadcast %cst_16 : f32 to vector<8x32xf32>
    %22 = vector.extract_strided_slice %19 {offsets = [0, 0], sizes = [8, 128], strides = [1, 1]} : vector<64x128xf32> to vector<8x128xf32>
    %c0_17 = arith.constant 0 : index
    %c0_18 = arith.constant 0 : index
    %23 = vector.load %arg7[%c0_17, %c0_18] : memref<32x128xf32, #tpu.memory_space<vmem>>, vector<32x128xf32>
    %cst_19 = arith.constant dense<0.000000e+00> : vector<8x128xf32>
    %24 = tpu.matmul %20, %23, %cst_19 {dimension_numbers = #tpu.dot_dimension_numbers<[1], [0], [0], [1], [0, 0, 1, 1], [], []>} : vector<8x32xf32>, vector<32x128xf32>, vector<8x128xf32> -> vector<8x128xf32>
    %25 = arith.addf %22, %24 : vector<8x128xf32>
    %26 = vector.extract_strided_slice %25 {offsets = [0, 0], sizes = [8, 96], strides = [1, 1]} : vector<8x128xf32> to vector<8x96xf32>
    %27 = arith.negf %26 : vector<8x96xf32>
    %28 = math.exp %27 : vector<8x96xf32>
    %cst_20 = arith.constant 1.000000e+00 : f32
    %29 = vector.broadcast %cst_20 : f32 to vector<8x96xf32>
    %30 = arith.addf %29, %28 : vector<8x96xf32>
    %31 = arith.divf %29, %30 : vector<8x96xf32>
    %32 = vector.extract_strided_slice %25 {offsets = [0, 96], sizes = [8, 32], strides = [1, 1]} : vector<8x128xf32> to vector<8x32xf32>
    %33 = math.tanh %32 : vector<8x32xf32>
    %34 = vector.extract_strided_slice %31 {offsets = [0, 0], sizes = [8, 32], strides = [1, 1]} : vector<8x96xf32> to vector<8x32xf32>
    %35 = vector.extract_strided_slice %31 {offsets = [0, 32], sizes = [8, 32], strides = [1, 1]} : vector<8x96xf32> to vector<8x32xf32>
    %36 = vector.extract_strided_slice %31 {offsets = [0, 64], sizes = [8, 32], strides = [1, 1]} : vector<8x96xf32> to vector<8x32xf32>
    %37 = arith.mulf %35, %21 : vector<8x32xf32>
    %38 = arith.mulf %34, %33 : vector<8x32xf32>
    %39 = arith.addf %37, %38 : vector<8x32xf32>
    %40 = math.tanh %39 : vector<8x32xf32>
    %41 = arith.mulf %36, %40 : vector<8x32xf32>
    %42 = vector.extract_strided_slice %19 {offsets = [8, 0], sizes = [8, 128], strides = [1, 1]} : vector<64x128xf32> to vector<8x128xf32>
    %c0_21 = arith.constant 0 : index
    %c0_22 = arith.constant 0 : index
    %43 = vector.load %arg7[%c0_21, %c0_22] : memref<32x128xf32, #tpu.memory_space<vmem>>, vector<32x128xf32>
    %cst_23 = arith.constant dense<0.000000e+00> : vector<8x128xf32>
    %44 = tpu.matmul %41, %43, %cst_23 {dimension_numbers = #tpu.dot_dimension_numbers<[1], [0], [0], [1], [0, 0, 1, 1], [], []>} : vector<8x32xf32>, vector<32x128xf32>, vector<8x128xf32> -> vector<8x128xf32>
    %45 = arith.addf %42, %44 : vector<8x128xf32>
    %46 = vector.extract_strided_slice %45 {offsets = [0, 0], sizes = [8, 96], strides = [1, 1]} : vector<8x128xf32> to vector<8x96xf32>
    %47 = arith.negf %46 : vector<8x96xf32>
    %48 = math.exp %47 : vector<8x96xf32>
    %cst_24 = arith.constant 1.000000e+00 : f32
    %49 = vector.broadcast %cst_24 : f32 to vector<8x96xf32>
    %50 = arith.addf %49, %48 : vector<8x96xf32>
    %51 = arith.divf %49, %50 : vector<8x96xf32>
    %52 = vector.extract_strided_slice %45 {offsets = [0, 96], sizes = [8, 32], strides = [1, 1]} : vector<8x128xf32> to vector<8x32xf32>
    %53 = math.tanh %52 : vector<8x32xf32>
    %54 = vector.extract_strided_slice %51 {offsets = [0, 0], sizes = [8, 32], strides = [1, 1]} : vector<8x96xf32> to vector<8x32xf32>
    %55 = vector.extract_strided_slice %51 {offsets = [0, 32], sizes = [8, 32], strides = [1, 1]} : vector<8x96xf32> to vector<8x32xf32>
    %56 = vector.extract_strided_slice %51 {offsets = [0, 64], sizes = [8, 32], strides = [1, 1]} : vector<8x96xf32> to vector<8x32xf32>
    %57 = arith.mulf %55, %39 : vector<8x32xf32>
    %58 = arith.mulf %54, %53 : vector<8x32xf32>
    %59 = arith.addf %57, %58 : vector<8x32xf32>
    %60 = math.tanh %59 : vector<8x32xf32>
    %61 = arith.mulf %56, %60 : vector<8x32xf32>
    %62 = vector.extract_strided_slice %19 {offsets = [16, 0], sizes = [8, 128], strides = [1, 1]} : vector<64x128xf32> to vector<8x128xf32>
    %c0_25 = arith.constant 0 : index
    %c0_26 = arith.constant 0 : index
    %63 = vector.load %arg7[%c0_25, %c0_26] : memref<32x128xf32, #tpu.memory_space<vmem>>, vector<32x128xf32>
    %cst_27 = arith.constant dense<0.000000e+00> : vector<8x128xf32>
    %64 = tpu.matmul %61, %63, %cst_27 {dimension_numbers = #tpu.dot_dimension_numbers<[1], [0], [0], [1], [0, 0, 1, 1], [], []>} : vector<8x32xf32>, vector<32x128xf32>, vector<8x128xf32> -> vector<8x128xf32>
    %65 = arith.addf %62, %64 : vector<8x128xf32>
    %66 = vector.extract_strided_slice %65 {offsets = [0, 0], sizes = [8, 96], strides = [1, 1]} : vector<8x128xf32> to vector<8x96xf32>
    %67 = arith.negf %66 : vector<8x96xf32>
    %68 = math.exp %67 : vector<8x96xf32>
    %cst_28 = arith.constant 1.000000e+00 : f32
    %69 = vector.broadcast %cst_28 : f32 to vector<8x96xf32>
    %70 = arith.addf %69, %68 : vector<8x96xf32>
    %71 = arith.divf %69, %70 : vector<8x96xf32>
    %72 = vector.extract_strided_slice %65 {offsets = [0, 96], sizes = [8, 32], strides = [1, 1]} : vector<8x128xf32> to vector<8x32xf32>
    %73 = math.tanh %72 : vector<8x32xf32>
    %74 = vector.extract_strided_slice %71 {offsets = [0, 0], sizes = [8, 32], strides = [1, 1]} : vector<8x96xf32> to vector<8x32xf32>
    %75 = vector.extract_strided_slice %71 {offsets = [0, 32], sizes = [8, 32], strides = [1, 1]} : vector<8x96xf32> to vector<8x32xf32>
    %76 = vector.extract_strided_slice %71 {offsets = [0, 64], sizes = [8, 32], strides = [1, 1]} : vector<8x96xf32> to vector<8x32xf32>
    %77 = arith.mulf %75, %59 : vector<8x32xf32>
    %78 = arith.mulf %74, %73 : vector<8x32xf32>
    %79 = arith.addf %77, %78 : vector<8x32xf32>
    %80 = math.tanh %79 : vector<8x32xf32>
    %81 = arith.mulf %76, %80 : vector<8x32xf32>
    %82 = vector.extract_strided_slice %19 {offsets = [24, 0], sizes = [8, 128], strides = [1, 1]} : vector<64x128xf32> to vector<8x128xf32>
    %c0_29 = arith.constant 0 : index
    %c0_30 = arith.constant 0 : index
    %83 = vector.load %arg7[%c0_29, %c0_30] : memref<32x128xf32, #tpu.memory_space<vmem>>, vector<32x128xf32>
    %cst_31 = arith.constant dense<0.000000e+00> : vector<8x128xf32>
    %84 = tpu.matmul %81, %83, %cst_31 {dimension_numbers = #tpu.dot_dimension_numbers<[1], [0], [0], [1], [0, 0, 1, 1], [], []>} : vector<8x32xf32>, vector<32x128xf32>, vector<8x128xf32> -> vector<8x128xf32>
    %85 = arith.addf %82, %84 : vector<8x128xf32>
    %86 = vector.extract_strided_slice %85 {offsets = [0, 0], sizes = [8, 96], strides = [1, 1]} : vector<8x128xf32> to vector<8x96xf32>
    %87 = arith.negf %86 : vector<8x96xf32>
    %88 = math.exp %87 : vector<8x96xf32>
    %cst_32 = arith.constant 1.000000e+00 : f32
    %89 = vector.broadcast %cst_32 : f32 to vector<8x96xf32>
    %90 = arith.addf %89, %88 : vector<8x96xf32>
    %91 = arith.divf %89, %90 : vector<8x96xf32>
    %92 = vector.extract_strided_slice %85 {offsets = [0, 96], sizes = [8, 32], strides = [1, 1]} : vector<8x128xf32> to vector<8x32xf32>
    %93 = math.tanh %92 : vector<8x32xf32>
    %94 = vector.extract_strided_slice %91 {offsets = [0, 0], sizes = [8, 32], strides = [1, 1]} : vector<8x96xf32> to vector<8x32xf32>
    %95 = vector.extract_strided_slice %91 {offsets = [0, 32], sizes = [8, 32], strides = [1, 1]} : vector<8x96xf32> to vector<8x32xf32>
    %96 = vector.extract_strided_slice %91 {offsets = [0, 64], sizes = [8, 32], strides = [1, 1]} : vector<8x96xf32> to vector<8x32xf32>
    %97 = arith.mulf %95, %79 : vector<8x32xf32>
    %98 = arith.mulf %94, %93 : vector<8x32xf32>
    %99 = arith.addf %97, %98 : vector<8x32xf32>
    %100 = math.tanh %99 : vector<8x32xf32>
    %101 = arith.mulf %96, %100 : vector<8x32xf32>
    %102 = vector.extract_strided_slice %19 {offsets = [32, 0], sizes = [8, 128], strides = [1, 1]} : vector<64x128xf32> to vector<8x128xf32>
    %c0_33 = arith.constant 0 : index
    %c0_34 = arith.constant 0 : index
    %103 = vector.load %arg7[%c0_33, %c0_34] : memref<32x128xf32, #tpu.memory_space<vmem>>, vector<32x128xf32>
    %cst_35 = arith.constant dense<0.000000e+00> : vector<8x128xf32>
    %104 = tpu.matmul %101, %103, %cst_35 {dimension_numbers = #tpu.dot_dimension_numbers<[1], [0], [0], [1], [0, 0, 1, 1], [], []>} : vector<8x32xf32>, vector<32x128xf32>, vector<8x128xf32> -> vector<8x128xf32>
    %105 = arith.addf %102, %104 : vector<8x128xf32>
    %106 = vector.extract_strided_slice %105 {offsets = [0, 0], sizes = [8, 96], strides = [1, 1]} : vector<8x128xf32> to vector<8x96xf32>
    %107 = arith.negf %106 : vector<8x96xf32>
    %108 = math.exp %107 : vector<8x96xf32>
    %cst_36 = arith.constant 1.000000e+00 : f32
    %109 = vector.broadcast %cst_36 : f32 to vector<8x96xf32>
    %110 = arith.addf %109, %108 : vector<8x96xf32>
    %111 = arith.divf %109, %110 : vector<8x96xf32>
    %112 = vector.extract_strided_slice %105 {offsets = [0, 96], sizes = [8, 32], strides = [1, 1]} : vector<8x128xf32> to vector<8x32xf32>
    %113 = math.tanh %112 : vector<8x32xf32>
    %114 = vector.extract_strided_slice %111 {offsets = [0, 0], sizes = [8, 32], strides = [1, 1]} : vector<8x96xf32> to vector<8x32xf32>
    %115 = vector.extract_strided_slice %111 {offsets = [0, 32], sizes = [8, 32], strides = [1, 1]} : vector<8x96xf32> to vector<8x32xf32>
    %116 = vector.extract_strided_slice %111 {offsets = [0, 64], sizes = [8, 32], strides = [1, 1]} : vector<8x96xf32> to vector<8x32xf32>
    %117 = arith.mulf %115, %99 : vector<8x32xf32>
    %118 = arith.mulf %114, %113 : vector<8x32xf32>
    %119 = arith.addf %117, %118 : vector<8x32xf32>
    %120 = math.tanh %119 : vector<8x32xf32>
    %121 = arith.mulf %116, %120 : vector<8x32xf32>
    %122 = vector.extract_strided_slice %19 {offsets = [40, 0], sizes = [8, 128], strides = [1, 1]} : vector<64x128xf32> to vector<8x128xf32>
    %c0_37 = arith.constant 0 : index
    %c0_38 = arith.constant 0 : index
    %123 = vector.load %arg7[%c0_37, %c0_38] : memref<32x128xf32, #tpu.memory_space<vmem>>, vector<32x128xf32>
    %cst_39 = arith.constant dense<0.000000e+00> : vector<8x128xf32>
    %124 = tpu.matmul %121, %123, %cst_39 {dimension_numbers = #tpu.dot_dimension_numbers<[1], [0], [0], [1], [0, 0, 1, 1], [], []>} : vector<8x32xf32>, vector<32x128xf32>, vector<8x128xf32> -> vector<8x128xf32>
    %125 = arith.addf %122, %124 : vector<8x128xf32>
    %126 = vector.extract_strided_slice %125 {offsets = [0, 0], sizes = [8, 96], strides = [1, 1]} : vector<8x128xf32> to vector<8x96xf32>
    %127 = arith.negf %126 : vector<8x96xf32>
    %128 = math.exp %127 : vector<8x96xf32>
    %cst_40 = arith.constant 1.000000e+00 : f32
    %129 = vector.broadcast %cst_40 : f32 to vector<8x96xf32>
    %130 = arith.addf %129, %128 : vector<8x96xf32>
    %131 = arith.divf %129, %130 : vector<8x96xf32>
    %132 = vector.extract_strided_slice %125 {offsets = [0, 96], sizes = [8, 32], strides = [1, 1]} : vector<8x128xf32> to vector<8x32xf32>
    %133 = math.tanh %132 : vector<8x32xf32>
    %134 = vector.extract_strided_slice %131 {offsets = [0, 0], sizes = [8, 32], strides = [1, 1]} : vector<8x96xf32> to vector<8x32xf32>
    %135 = vector.extract_strided_slice %131 {offsets = [0, 32], sizes = [8, 32], strides = [1, 1]} : vector<8x96xf32> to vector<8x32xf32>
    %136 = vector.extract_strided_slice %131 {offsets = [0, 64], sizes = [8, 32], strides = [1, 1]} : vector<8x96xf32> to vector<8x32xf32>
    %137 = arith.mulf %135, %119 : vector<8x32xf32>
    %138 = arith.mulf %134, %133 : vector<8x32xf32>
    %139 = arith.addf %137, %138 : vector<8x32xf32>
    %140 = math.tanh %139 : vector<8x32xf32>
    %141 = arith.mulf %136, %140 : vector<8x32xf32>
    %142 = vector.extract_strided_slice %19 {offsets = [48, 0], sizes = [8, 128], strides = [1, 1]} : vector<64x128xf32> to vector<8x128xf32>
    %c0_41 = arith.constant 0 : index
    %c0_42 = arith.constant 0 : index
    %143 = vector.load %arg7[%c0_41, %c0_42] : memref<32x128xf32, #tpu.memory_space<vmem>>, vector<32x128xf32>
    %cst_43 = arith.constant dense<0.000000e+00> : vector<8x128xf32>
    %144 = tpu.matmul %141, %143, %cst_43 {dimension_numbers = #tpu.dot_dimension_numbers<[1], [0], [0], [1], [0, 0, 1, 1], [], []>} : vector<8x32xf32>, vector<32x128xf32>, vector<8x128xf32> -> vector<8x128xf32>
    %145 = arith.addf %142, %144 : vector<8x128xf32>
    %146 = vector.extract_strided_slice %145 {offsets = [0, 0], sizes = [8, 96], strides = [1, 1]} : vector<8x128xf32> to vector<8x96xf32>
    %147 = arith.negf %146 : vector<8x96xf32>
    %148 = math.exp %147 : vector<8x96xf32>
    %cst_44 = arith.constant 1.000000e+00 : f32
    %149 = vector.broadcast %cst_44 : f32 to vector<8x96xf32>
    %150 = arith.addf %149, %148 : vector<8x96xf32>
    %151 = arith.divf %149, %150 : vector<8x96xf32>
    %152 = vector.extract_strided_slice %145 {offsets = [0, 96], sizes = [8, 32], strides = [1, 1]} : vector<8x128xf32> to vector<8x32xf32>
    %153 = math.tanh %152 : vector<8x32xf32>
    %154 = vector.extract_strided_slice %151 {offsets = [0, 0], sizes = [8, 32], strides = [1, 1]} : vector<8x96xf32> to vector<8x32xf32>
    %155 = vector.extract_strided_slice %151 {offsets = [0, 32], sizes = [8, 32], strides = [1, 1]} : vector<8x96xf32> to vector<8x32xf32>
    %156 = vector.extract_strided_slice %151 {offsets = [0, 64], sizes = [8, 32], strides = [1, 1]} : vector<8x96xf32> to vector<8x32xf32>
    %157 = arith.mulf %155, %139 : vector<8x32xf32>
    %158 = arith.mulf %154, %153 : vector<8x32xf32>
    %159 = arith.addf %157, %158 : vector<8x32xf32>
    %160 = math.tanh %159 : vector<8x32xf32>
    %161 = arith.mulf %156, %160 : vector<8x32xf32>
    %162 = vector.extract_strided_slice %19 {offsets = [56, 0], sizes = [8, 128], strides = [1, 1]} : vector<64x128xf32> to vector<8x128xf32>
    %c0_45 = arith.constant 0 : index
    %c0_46 = arith.constant 0 : index
    %163 = vector.load %arg7[%c0_45, %c0_46] : memref<32x128xf32, #tpu.memory_space<vmem>>, vector<32x128xf32>
    %cst_47 = arith.constant dense<0.000000e+00> : vector<8x128xf32>
    %164 = tpu.matmul %161, %163, %cst_47 {dimension_numbers = #tpu.dot_dimension_numbers<[1], [0], [0], [1], [0, 0, 1, 1], [], []>} : vector<8x32xf32>, vector<32x128xf32>, vector<8x128xf32> -> vector<8x128xf32>
    %165 = arith.addf %162, %164 : vector<8x128xf32>
    %166 = vector.extract_strided_slice %165 {offsets = [0, 0], sizes = [8, 96], strides = [1, 1]} : vector<8x128xf32> to vector<8x96xf32>
    %167 = arith.negf %166 : vector<8x96xf32>
    %168 = math.exp %167 : vector<8x96xf32>
    %cst_48 = arith.constant 1.000000e+00 : f32
    %169 = vector.broadcast %cst_48 : f32 to vector<8x96xf32>
    %170 = arith.addf %169, %168 : vector<8x96xf32>
    %171 = arith.divf %169, %170 : vector<8x96xf32>
    %172 = vector.extract_strided_slice %165 {offsets = [0, 96], sizes = [8, 32], strides = [1, 1]} : vector<8x128xf32> to vector<8x32xf32>
    %173 = math.tanh %172 : vector<8x32xf32>
    %174 = vector.extract_strided_slice %171 {offsets = [0, 0], sizes = [8, 32], strides = [1, 1]} : vector<8x96xf32> to vector<8x32xf32>
    %175 = vector.extract_strided_slice %171 {offsets = [0, 32], sizes = [8, 32], strides = [1, 1]} : vector<8x96xf32> to vector<8x32xf32>
    %176 = vector.extract_strided_slice %171 {offsets = [0, 64], sizes = [8, 32], strides = [1, 1]} : vector<8x96xf32> to vector<8x32xf32>
    %177 = arith.mulf %175, %159 : vector<8x32xf32>
    %178 = arith.mulf %174, %173 : vector<8x32xf32>
    %179 = arith.addf %177, %178 : vector<8x32xf32>
    %180 = math.tanh %179 : vector<8x32xf32>
    %181 = arith.mulf %176, %180 : vector<8x32xf32>
    %182 = tpu.concatenate %41, %61, %81, %101, %121, %141, %161, %181 in 0 : vector<8x32xf32>, vector<8x32xf32>, vector<8x32xf32>, vector<8x32xf32>, vector<8x32xf32>, vector<8x32xf32>, vector<8x32xf32>, vector<8x32xf32> -> vector<64x32xf32>
    %c0_49 = arith.constant 0 : index
    %c0_50 = arith.constant 0 : index
    %183 = vector.load %arg8[%c0_49, %c0_50] : memref<32x32xf32, #tpu.memory_space<vmem>>, vector<32x32xf32>
    %cst_51 = arith.constant dense<0.000000e+00> : vector<64x32xf32>
    %184 = tpu.matmul %182, %183, %cst_51 {dimension_numbers = #tpu.dot_dimension_numbers<[1], [0], [0], [1], [0, 0, 1, 1], [], []>} : vector<64x32xf32>, vector<32x32xf32>, vector<64x32xf32> -> vector<64x32xf32>
    %c0_52 = arith.constant 0 : index
    %c0_53 = arith.constant 0 : index
    %185 = vector.load %arg9[%c0_52, %c0_53] : memref<1x32xf32, #tpu.memory_space<vmem>>, vector<1x32xf32>
    %186 = vector.broadcast %185 : vector<1x32xf32> to vector<64x32xf32>
    %187 = arith.addf %184, %186 : vector<64x32xf32>
    %cst_54 = arith.constant dense<0xFF800000> : vector<64xf32>
    %188 = vector.multi_reduction <maximumf>, %187, %cst_54 [1] : vector<64x32xf32> to vector<64xf32>
    %189 = vector.shape_cast %188 : vector<64xf32> to vector<64x1xf32>
    %190 = vector.broadcast %189 : vector<64x1xf32> to vector<64x32xf32>
    %191 = arith.subf %187, %190 : vector<64x32xf32>
    %192 = math.exp %191 : vector<64x32xf32>
    %cst_55 = arith.constant dense<0.000000e+00> : vector<64xf32>
    %193 = vector.multi_reduction <add>, %192, %cst_55 [1] : vector<64x32xf32> to vector<64xf32>
    %194 = vector.shape_cast %193 : vector<64xf32> to vector<64x1xf32>
    %195 = math.log %194 : vector<64x1xf32>
    %196 = arith.addf %195, %189 : vector<64x1xf32>
    %197 = vector.broadcast %196 : vector<64x1xf32> to vector<64x32xf32>
    %198 = arith.subf %187, %197 : vector<64x32xf32>
    %c0_56 = arith.constant 0 : index
    %c0_57 = arith.constant 0 : index
    %199 = vector.load %arg10[%c0_56, %c0_57] : memref<64x32xf32, #tpu.memory_space<vmem>>, vector<64x32xf32>
    tpu.vector_store %arg10[%c0_56, %c0_57], %198 {strides = array<i32>} : memref<64x32xf32, #tpu.memory_space<vmem>>, vector<64x32xf32>,
    return
  }
}

</mosaic_0001>

<llo_original>
// kernel: tpu_custom_call.1
$region0: #{tpu_custom_call.1}
  #allocation0 [shape = 'u32[]', space=smem, size = 0x4, offset = 0x4, fixed_abs, tag = 'smem constant byte address 0x4 - core index']
  #allocation1 [shape = 'u32[144,128]{1,0:T(1,128)}', space=vmem, size = 0x12000, scoped, tag = 'internal scratch']
  %s0 = inlined_call_operand.vmem [shape: s32[56,1], index: 0, kind: input, shape index: {}]
  %s1 = inlined_call_operand.hbm [shape: f32[8,64], index: 1, kind: input, shape index: {}]
  %s2 = inlined_call_operand.vmem [shape: f32[64,32], index: 2, kind: input, shape index: {}]
  %s3 = inlined_call_operand.hbm [shape: f32[1,32], index: 3, kind: input, shape index: {}]
  %s4 = inlined_call_operand.vmem [shape: f32[32,32], index: 4, kind: input, shape index: {}]
  %s5 = inlined_call_operand.vmem [shape: f32[32,128], index: 5, kind: input, shape index: {}]
  %s6 = inlined_call_operand.vmem [shape: f32[1,128], index: 6, kind: input, shape index: {}]
  %s7 = inlined_call_operand.vmem [shape: f32[32,128], index: 7, kind: input, shape index: {}]
  %s8 = inlined_call_operand.vmem [shape: f32[32,32], index: 8, kind: input, shape index: {}]
  %s9 = inlined_call_operand.vmem [shape: f32[1,32], index: 9, kind: input, shape index: {}]
  %s10 = inlined_call_operand.vmem [shape: f32[64,32], index: 10, kind: output, shape index: {}]
  %s11 = sld [smem:[#allocation0]]
  $region58: #{tpu_custom_call.1} parent=0
    _
  %s13 = ssub.s32 1, %s11
  %s14 = scalar_select 0, %s13, %s11
  $region1: #{tpu_custom_call.1} parent=0
    #allocation2 [shape = 'u8[4096]{0}', space=vmem, size = 0x1000, scoped, tag = 'input window, operand 1, single buffered']
    #allocation3 [shape = 's32[1]{0}', space=sflag, size = 0x4, scoped, tag = 'scoped memory for tpu_custom_call.1']
    #allocation4 [shape = 'u8[512]{0}', space=vmem, size = 0x400, scoped, tag = 'input window, operand 3, single buffered']
    #allocation5 [shape = 's32[1]{0}', space=sflag, size = 0x4, scoped, tag = 'scoped memory for tpu_custom_call.1']
    %15 = vsyncpa [#allocation3], 0
    %16 = vsyncpa [#allocation5], 0
    // Predicated region
    $region2: #{tpu_custom_call.1} parent=1 // pred_check
      _
    $region3: #{tpu_custom_call.1} parent=1 // pred_check_branch
      %18 = sbr.rel (0) target = $region5
    $region4: #{tpu_custom_call.1} parent=1 // pred_region
      _
    $region5: #{tpu_custom_call.1} parent=1 // pred_fallthru
      _
    // Predicated region
    $region6: #{tpu_custom_call.1} parent=1 // pred_check
      _
    $region7: #{tpu_custom_call.1} parent=1 // pred_check_branch
      %20 = sbr.rel (0) target = $region9
    $region8: #{tpu_custom_call.1} parent=1 // pred_region
      %s22 = ssub.s32 128, 128
      %23 = vsyncadd [#allocation3], %s22
      %s25 = sshll.u32 [#allocation2], 4
      %s26 = int_to_ptr.vmem [resolvable:$true] %s25
      %28 = dma.hbm_to_vmem [thread:$0]  %s1, 128, %s26, [#allocation3]
    $region9: #{tpu_custom_call.1} parent=1 // pred_fallthru
      _
    // Predicated region
    $region10: #{tpu_custom_call.1} parent=1 // pred_check
      _
    $region11: #{tpu_custom_call.1} parent=1 // pred_check_branch
      %30 = sbr.rel (0) target = $region13
    $region12: #{tpu_custom_call.1} parent=1 // pred_region
      _
    $region13: #{tpu_custom_call.1} parent=1 // pred_fallthru
      _
    // Predicated region
    $region14: #{tpu_custom_call.1} parent=1 // pred_check
      _
    $region15: #{tpu_custom_call.1} parent=1 // pred_check_branch
      %32 = sbr.rel (0) target = $region17
    $region16: #{tpu_custom_call.1} parent=1 // pred_region
      %s34 = ssub.s32 16, 16
      %35 = vsyncadd [#allocation5], %s34
      %s37 = sshll.u32 [#allocation4], 4
      %s38 = int_to_ptr.vmem [resolvable:$true] %s37
      %40 = dma.hbm_to_vmem [thread:$0]  %s3, 16, %s38, [#allocation5]
    $region17: #{tpu_custom_call.1} parent=1 // pred_fallthru
      _
    // Predicated region
    $region18: #{tpu_custom_call.1} parent=1 // pred_check
      _
    $region19: #{tpu_custom_call.1} parent=1 // pred_check_branch
      %42 = sbr.rel (0) target = $region21
    $region20: #{tpu_custom_call.1} parent=1 // pred_region
      _
    $region21: #{tpu_custom_call.1} parent=1 // pred_fallthru
      _
    // Predicated region
    $region22: #{tpu_custom_call.1} parent=1 // pred_check
      _
    $region23: #{tpu_custom_call.1} parent=1 // pred_check_branch
      %44 = sbr.rel (0) target = $region25
    $region24: #{tpu_custom_call.1} parent=1 // pred_region
      _
    $region25: #{tpu_custom_call.1} parent=1 // pred_fallthru
      _
    // Predicated region
    $region26: #{tpu_custom_call.1} parent=1 // pred_check
      _
    $region27: #{tpu_custom_call.1} parent=1 // pred_check_branch
      %46 = sbr.rel (0) target = $region29
    $region28: #{tpu_custom_call.1} parent=1 // pred_region
      _
    $region29: #{tpu_custom_call.1} parent=1 // pred_fallthru
      _
    // Predicated region
    $region30: #{tpu_custom_call.1} parent=1 // pred_check
      _
    $region31: #{tpu_custom_call.1} parent=1 // pred_check_branch
      %48 = sbr.rel (0) target = $region33
    $region32: #{tpu_custom_call.1} parent=1 // pred_region
      _
    $region33: #{tpu_custom_call.1} parent=1 // pred_fallthru
      _
    // Predicated region
    $region34: #{tpu_custom_call.1} parent=1 // pred_check
      _
    $region35: #{tpu_custom_call.1} parent=1 // pred_check_branch
      %50 = sbr.rel (0) target = $region37
    $region36: #{tpu_custom_call.1} parent=1 // pred_region
      _
    $region37: #{tpu_custom_call.1} parent=1 // pred_fallthru
      _
    // Predicated region
    $region38: #{tpu_custom_call.1} parent=1 // pred_check
      _
    $region39: #{tpu_custom_call.1} parent=1 // pred_check_branch
      %52 = sbr.rel (0) target = $region41
    $region40: #{tpu_custom_call.1} parent=1 // pred_region
      _
    $region41: #{tpu_custom_call.1} parent=1 // pred_fallthru
      _
    // Predicated region
    $region42: #{tpu_custom_call.1} parent=1 // pred_check
      _
    $region43: #{tpu_custom_call.1} parent=1 // pred_check_branch
      %54 = sbr.rel (0) target = $region45
    $region44: #{tpu_custom_call.1} parent=1 // pred_region
      %55 = dma.done [#allocation3], 128
    $region45: #{tpu_custom_call.1} parent=1 // pred_fallthru
      _
    // Predicated region
    $region46: #{tpu_custom_call.1} parent=1 // pred_check
      _
    $region47: #{tpu_custom_call.1} parent=1 // pred_check_branch
      %57 = sbr.rel (0) target = $region49
    $region48: #{tpu_custom_call.1} parent=1 // pred_region
      %58 = dma.done [#allocation5], 16
    $region49: #{tpu_custom_call.1} parent=1 // pred_fallthru
      _
    %v59 = vld [vmem:[#allocation2] sm:$0xff]
    %v60 = vld [vmem:[%s2] sm:$0xff]
    %v61 = vld [vmem:[%s2 + $0x8] sm:$0xff]
    %v62 = vld [vmem:[%s2 + $0x10] sm:$0xff]
    %v63 = vld [vmem:[%s2 + $0x18] sm:$0xff]
    %v64 = vld [vmem:[%s2 + $0x20] sm:$0xff]
    %v65 = vld [vmem:[%s2 + $0x28] sm:$0xff]
    %v66 = vld [vmem:[%s2 + $0x30] sm:$0xff]
    %v67 = vld [vmem:[%s2 + $0x38] sm:$0xff]
    %v68 = vld [vmem:[#allocation4] sm:$0x1]
    %v70 = vlaneseq
    %v71 = vshrl.u32 %v70, 7
    %v72 = vsub.s32 0, %v71
    %v73 = vrot.slane %v68, %v72
    %vm75 = vcmask 523264
    %v77 = vsel %vm75, %v59, 0
    %79 = vmatprep.subr.mxu0 0.0
    %80 = vmatpush1.msra.mxu0 0.0
    %81 = vmatprep.subr.mxu0 0.0
    %82 = vmatpush1.msra.mxu0 0.0
    %83 = vmatprep.subr.mxu0 0.0
    %84 = vmatpush1.msra.mxu0 0.0
    %85 = vmatprep.subr.mxu0 0.0
    %86 = vmatpush1.msra.mxu0 0.0
    %87 = vmatprep.subr.mxu0 0.0
    %88 = vmatpush1.msra.mxu0 0.0
    %89 = vmatprep.subr.mxu0 0.0
    %90 = vmatpush1.msra.mxu0 0.0
    %91 = vmatprep.subr.mxu0 0.0
    %92 = vmatpush1.msra.mxu0 0.0
    %93 = vmatprep.subr.mxu0 0.0
    %94 = vmatpush1.msra.mxu0 0.0
    %95 = vmatprep.subr.mxu0 0.0
    %96 = vmatpush1.msra.mxu0 %v67
    %97 = vmatprep.subr.mxu0 0.0
    %98 = vmatpush1.msra.mxu0 %v66
    %99 = vmatprep.subr.mxu0 0.0
    %100 = vmatpush1.msra.mxu0 %v65
    %101 = vmatprep.subr.mxu0 0.0
    %102 = vmatpush1.msra.mxu0 %v64
    %103 = vmatprep.subr.mxu0 0.0
    %104 = vmatpush1.msra.mxu0 %v63
    %105 = vmatprep.subr.mxu0 0.0
    %106 = vmatpush1.msra.mxu0 %v62
    %107 = vmatprep.subr.mxu0 0.0
    %108 = vmatpush1.msra.mxu0 %v61
    %109 = vmatprep.subr.mxu0 0.0
    %110 = vmatpush1.msra.mxu0 %v60
    %111 = vmatprep.subr.mxu0 0.0
    %112 = vmatpush2.msra.mxu0 0.0
    %113 = vmatprep.subr.mxu0 0.0
    %114 = vmatpush2.msra.mxu0 0.0
    %115 = vmatprep.subr.mxu0 0.0
    %116 = vmatpush2.msra.mxu0 0.0
    %117 = vmatprep.subr.mxu0 0.0
    %118 = vmatpush2.msra.mxu0 0.0
    %119 = vmatprep.subr.mxu0 0.0
    %120 = vmatpush2.msra.mxu0 0.0
    %121 = vmatprep.subr.mxu0 0.0
    %122 = vmatpush2.msra.mxu0 0.0
    %123 = vmatprep.subr.mxu0 0.0
    %124 = vmatpush2.msra.mxu0 0.0
    %125 = vmatprep.subr.mxu0 0.0
    %126 = vmatpush2.msra.mxu0 0.0
    %127 = vmatprep.subr.mxu0 0.0
    %128 = vmatpush2.msra.mxu0 0.0
    %129 = vmatprep.subr.mxu0 0.0
    %130 = vmatpush2.msra.mxu0 0.0
    %131 = vmatprep.subr.mxu0 0.0
    %132 = vmatpush2.msra.mxu0 0.0
    %133 = vmatprep.subr.mxu0 0.0
    %134 = vmatpush2.msra.mxu0 0.0
    %135 = vmatprep.subr.mxu0 0.0
    %136 = vmatpush2.msra.mxu0 0.0
    %137 = vmatprep.subr.mxu0 0.0
    %138 = vmatpush2.msra.mxu0 0.0
    %139 = vmatprep.subr.mxu0 0.0
    %140 = vmatpush2.msra.mxu0 0.0
    %141 = vmatprep.subr.mxu0 0.0
    %142 = vmatpush2.msra.mxu0 0.0
    %143 = vmatprep.mubr.f32.mxu0 0.0
    %144 = vmatmul.mubr.f32.gmra.mxu0 %v77
    %v145 = vpop.f32.mrf.mxu0
    %v146 = vadd.f32 %v73, %v145
    %v147 = vpop.f32.mrf.mxu0
    %148 = vdwg.mxu0
    %v149 = vld [vmem:[%s0] sm:$0xff]
    %v150 = vld [vmem:[%s0 + $0x8] sm:$0xff]
    %v151 = vld [vmem:[%s0 + $0x10] sm:$0xff]
    %v152 = vld [vmem:[%s0 + $0x18] sm:$0xff]
    %v153 = vld [vmem:[%s0 + $0x20] sm:$0xff]
    %v154 = vld [vmem:[%s0 + $0x28] sm:$0xff]
    %v155 = vld [vmem:[%s0 + $0x30] sm:$0xff]
    %v156 = vlaneseq
    %v157 = vand.u32 %v156, 127
    %158 = vset.pattern.permute.xlu0 0
    %159 = vperm.xlu0 %158, %v149
    %v160 = vpop.permute.xlu0 %159
    %161 = vset.pattern.permute.xlu0 0
    %162 = vperm.xlu0 %161, %v150
    %v163 = vpop.permute.xlu0 %162
    %164 = vset.pattern.permute.xlu0 0
    %165 = vperm.xlu0 %164, %v151
    %v166 = vpop.permute.xlu0 %165
    %167 = vset.pattern.permute.xlu0 0
    %168 = vperm.xlu0 %167, %v152
    %v169 = vpop.permute.xlu0 %168
    %170 = vset.pattern.permute.xlu0 0
    %171 = vperm.xlu0 %170, %v153
    %v172 = vpop.permute.xlu0 %171
    %173 = vset.pattern.permute.xlu0 0
    %174 = vperm.xlu0 %173, %v154
    %v175 = vpop.permute.xlu0 %174
    %176 = vset.pattern.permute.xlu0 0
    %177 = vperm.xlu0 %176, %v155
    %v178 = vpop.permute.xlu0 %177
    %vm179 = vcmp.eq.s32.totalorder %v157, %v160
    %vm180 = vcmp.eq.s32.totalorder %v157, %v163
    %vm181 = vcmp.eq.s32.totalorder %v157, %v166
    %vm182 = vcmp.eq.s32.totalorder %v157, %v169
    %vm183 = vcmp.eq.s32.totalorder %v157, %v172
    %vm184 = vcmp.eq.s32.totalorder %v157, %v175
    %vm185 = vcmp.eq.s32.totalorder %v157, %v178
    %v186 = vsel %vm179, 1, 0
    %v187 = vsel %vm180, 1, 0
    %v188 = vsel %vm181, 1, 0
    %v189 = vsel %vm182, 1, 0
    %v190 = vsel %vm183, 1, 0
    %v191 = vsel %vm184, 1, 0
    %v192 = vsel %vm185, 1, 0
    %v193 = vcvt.s32.f32 %v186
    %v194 = vcvt.s32.f32 %v187
    %v195 = vcvt.s32.f32 %v188
    %v196 = vcvt.s32.f32 %v189
    %v197 = vcvt.s32.f32 %v190
    %v198 = vcvt.s32.f32 %v191
    %v199 = vcvt.s32.f32 %v192
    %v200 = vld [vmem:[%s4] sm:$0xff]
    %v201 = vld [vmem:[%s4 + $0x8] sm:$0xff]
    %v202 = vld [vmem:[%s4 + $0x10] sm:$0xff]
    %v203 = vld [vmem:[%s4 + $0x18] sm:$0xff]
    %vm204 = vcmask 261120
    %v206 = vsel %vm204, %v193, 0
    %v209 = vsel %vm204, %v194, 0
    %v212 = vsel %vm204, %v195, 0
    %v215 = vsel %vm204, %v196, 0
    %v218 = vsel %vm204, %v197, 0
    %v221 = vsel %vm204, %v198, 0
    %v224 = vsel %vm204, %v199, 0
    %226 = vmatprep.subr.mxu0 0.0
    %227 = vmatpush1.msra.mxu0 0.0
    %228 = vmatprep.subr.mxu0 0.0
    %229 = vmatpush1.msra.mxu0 0.0
    %230 = vmatprep.subr.mxu0 0.0
    %231 = vmatpush1.msra.mxu0 0.0
    %232 = vmatprep.subr.mxu0 0.0
    %233 = vmatpush1.msra.mxu0 0.0
    %234 = vmatprep.subr.mxu0 0.0
    %235 = vmatpush1.msra.mxu0 0.0
    %236 = vmatprep.subr.mxu0 0.0
    %237 = vmatpush1.msra.mxu0 0.0
    %238 = vmatprep.subr.mxu0 0.0
    %239 = vmatpush1.msra.mxu0 0.0
    %240 = vmatprep.subr.mxu0 0.0
    %241 = vmatpush1.msra.mxu0 0.0
    %242 = vmatprep.subr.mxu0 0.0
    %243 = vmatpush1.msra.mxu0 0.0
    %244 = vmatprep.subr.mxu0 0.0
    %245 = vmatpush1.msra.mxu0 0.0
    %246 = vmatprep.subr.mxu0 0.0
    %247 = vmatpush1.msra.mxu0 0.0
    %248 = vmatprep.subr.mxu0 0.0
    %249 = vmatpush1.msra.mxu0 0.0
    %250 = vmatprep.subr.mxu0 0.0
    %251 = vmatpush1.msra.mxu0 %v203
    %252 = vmatprep.subr.mxu0 0.0
    %253 = vmatpush1.msra.mxu0 %v202
    %254 = vmatprep.subr.mxu0 0.0
    %255 = vmatpush1.msra.mxu0 %v201
    %256 = vmatprep.subr.mxu0 0.0
    %257 = vmatpush1.msra.mxu0 %v200
    %258 = vmatprep.subr.mxu0 0.0
    %259 = vmatpush2.msra.mxu0 0.0
    %260 = vmatprep.subr.mxu0 0.0
    %261 = vmatpush2.msra.mxu0 0.0
    %262 = vmatprep.subr.mxu0 0.0
    %263 = vmatpush2.msra.mxu0 0.0
    %264 = vmatprep.subr.mxu0 0.0
    %265 = vmatpush2.msra.mxu0 0.0
    %266 = vmatprep.subr.mxu0 0.0
    %267 = vmatpush2.msra.mxu0 0.0
    %268 = vmatprep.subr.mxu0 0.0
    %269 = vmatpush2.msra.mxu0 0.0
    %270 = vmatprep.subr.mxu0 0.0
    %271 = vmatpush2.msra.mxu0 0.0
    %272 = vmatprep.subr.mxu0 0.0
    %273 = vmatpush2.msra.mxu0 0.0
    %274 = vmatprep.subr.mxu0 0.0
    %275 = vmatpush2.msra.mxu0 0.0
    %276 = vmatprep.subr.mxu0 0.0
    %277 = vmatpush2.msra.mxu0 0.0
    %278 = vmatprep.subr.mxu0 0.0
    %279 = vmatpush2.msra.mxu0 0.0
    %280 = vmatprep.subr.mxu0 0.0
    %281 = vmatpush2.msra.mxu0 0.0
    %282 = vmatprep.subr.mxu0 0.0
    %283 = vmatpush2.msra.mxu0 0.0
    %284 = vmatprep.subr.mxu0 0.0
    %285 = vmatpush2.msra.mxu0 0.0
    %286 = vmatprep.subr.mxu0 0.0
    %287 = vmatpush2.msra.mxu0 0.0
    %288 = vmatprep.subr.mxu0 0.0
    %289 = vmatpush2.msra.mxu0 0.0
    %290 = vmatprep.mubr.f32.mxu0 0.0
    %291 = vmatmul.mubr.f32.gmra.mxu0 %v206
    %v292 = vpop.f32.mrf.mxu0
    %v293 = vadd.f32 0.0, %v292
    %v294 = vpop.f32.mrf.mxu0
    %295 = vmatprep.mubr.f32.mxu0 0.0
    %296 = vmatmul.mubr.f32.gmra.mxu0 %v209
    %v297 = vpop.f32.mrf.mxu0
    %v298 = vadd.f32 0.0, %v297
    %v299 = vpop.f32.mrf.mxu0
    %300 = vmatprep.mubr.f32.mxu0 0.0
    %301 = vmatmul.mubr.f32.gmra.mxu0 %v212
    %v302 = vpop.f32.mrf.mxu0
    %v303 = vadd.f32 0.0, %v302
    %v304 = vpop.f32.mrf.mxu0
    %305 = vmatprep.mubr.f32.mxu0 0.0
    %306 = vmatmul.mubr.f32.gmra.mxu0 %v215
    %v307 = vpop.f32.mrf.mxu0
    %v308 = vadd.f32 0.0, %v307
    %v309 = vpop.f32.mrf.mxu0
    %310 = vmatprep.mubr.f32.mxu0 0.0
    %311 = vmatmul.mubr.f32.gmra.mxu0 %v218
    %v312 = vpop.f32.mrf.mxu0
    %v313 = vadd.f32 0.0, %v312
    %v314 = vpop.f32.mrf.mxu0
    %315 = vmatprep.mubr.f32.mxu0 0.0
    %316 = vmatmul.mubr.f32.gmra.mxu0 %v221
    %v317 = vpop.f32.mrf.mxu0
    %v318 = vadd.f32 0.0, %v317
    %v319 = vpop.f32.mrf.mxu0
    %320 = vmatprep.mubr.f32.mxu0 0.0
    %321 = vmatmul.mubr.f32.gmra.mxu0 %v224
    %v322 = vpop.f32.mrf.mxu0
    %v323 = vadd.f32 0.0, %v322
    %v324 = vpop.f32.mrf.mxu0
    %325 = vdwg.mxu0
    %v326 = vld [vmem:[%s5] sm:$0xff]
    %v327 = vld [vmem:[%s5 + $0x8] sm:$0xff]
    %v328 = vld [vmem:[%s5 + $0x10] sm:$0xff]
    %v329 = vld [vmem:[%s5 + $0x18] sm:$0xff]
    %v330 = vld [vmem:[%s6] sm:$0x1]
    %v332 = vlaneseq
    %v333 = vshrl.u32 %v332, 7
    %v334 = vsub.s32 0, %v333
    %v335 = vrot.slane %v330, %v334
    %v338 = vsel %vm204, %v146, 0
    %v341 = vsel %vm204, %v293, 0
    %v344 = vsel %vm204, %v298, 0
    %v347 = vsel %vm204, %v303, 0
    %v350 = vsel %vm204, %v308, 0
    %v353 = vsel %vm204, %v313, 0
    %v356 = vsel %vm204, %v318, 0
    %v359 = vsel %vm204, %v323, 0
    %361 = vmatprep.subr.mxu0 0.0
    %362 = vmatpush1.msra.mxu0 0.0
    %363 = vmatprep.subr.mxu0 0.0
    %364 = vmatpush1.msra.mxu0 0.0
    %365 = vmatprep.subr.mxu0 0.0
    %366 = vmatpush1.msra.mxu0 0.0
    %367 = vmatprep.subr.mxu0 0.0
    %368 = vmatpush1.msra.mxu0 0.0
    %369 = vmatprep.subr.mxu0 0.0
    %370 = vmatpush1.msra.mxu0 0.0
    %371 = vmatprep.subr.mxu0 0.0
    %372 = vmatpush1.msra.mxu0 0.0
    %373 = vmatprep.subr.mxu0 0.0
    %374 = vmatpush1.msra.mxu0 0.0
    %375 = vmatprep.subr.mxu0 0.0
    %376 = vmatpush1.msra.mxu0 0.0
    %377 = vmatprep.subr.mxu0 0.0
    %378 = vmatpush1.msra.mxu0 0.0
    %379 = vmatprep.subr.mxu0 0.0
    %380 = vmatpush1.msra.mxu0 0.0
    %381 = vmatprep.subr.mxu0 0.0
    %382 = vmatpush1.msra.mxu0 0.0
    %383 = vmatprep.subr.mxu0 0.0
    %384 = vmatpush1.msra.mxu0 0.0
    %385 = vmatprep.subr.mxu0 0.0
    %386 = vmatpush1.msra.mxu0 %v329
    %387 = vmatprep.subr.mxu0 0.0
    %388 = vmatpush1.msra.mxu0 %v328
    %389 = vmatprep.subr.mxu0 0.0
    %390 = vmatpush1.msra.mxu0 %v327
    %391 = vmatprep.subr.mxu0 0.0
    %392 = vmatpush1.msra.mxu0 %v326
    %393 = vmatprep.subr.mxu0 0.0
    %394 = vmatpush2.msra.mxu0 0.0
    %395 = vmatprep.subr.mxu0 0.0
    %396 = vmatpush2.msra.mxu0 0.0
    %397 = vmatprep.subr.mxu0 0.0
    %398 = vmatpush2.msra.mxu0 0.0
    %399 = vmatprep.subr.mxu0 0.0
    %400 = vmatpush2.msra.mxu0 0.0
    %401 = vmatprep.subr.mxu0 0.0
    %402 = vmatpush2.msra.mxu0 0.0
    %403 = vmatprep.subr.mxu0 0.0
    %404 = vmatpush2.msra.mxu0 0.0
    %405 = vmatprep.subr.mxu0 0.0
    %406 = vmatpush2.msra.mxu0 0.0
    %407 = vmatprep.subr.mxu0 0.0
    %408 = vmatpush2.msra.mxu0 0.0
    %409 = vmatprep.subr.mxu0 0.0
    %410 = vmatpush2.msra.mxu0 0.0
    %411 = vmatprep.subr.mxu0 0.0
    %412 = vmatpush2.msra.mxu0 0.0
    %413 = vmatprep.subr.mxu0 0.0
    %414 = vmatpush2.msra.mxu0 0.0
    %415 = vmatprep.subr.mxu0 0.0
    %416 = vmatpush2.msra.mxu0 0.0
    %417 = vmatprep.subr.mxu0 0.0
    %418 = vmatpush2.msra.mxu0 0.0
    %419 = vmatprep.subr.mxu0 0.0
    %420 = vmatpush2.msra.mxu0 0.0
    %421 = vmatprep.subr.mxu0 0.0
    %422 = vmatpush2.msra.mxu0 0.0
    %423 = vmatprep.subr.mxu0 0.0
    %424 = vmatpush2.msra.mxu0 0.0
    %425 = vmatprep.mubr.f32.mxu0 0.0
    %426 = vmatmul.mubr.f32.gmra.mxu0 %v338
    %v427 = vpop.f32.mrf.mxu0
    %v428 = vadd.f32 %v335, %v427
    %v429 = vpop.f32.mrf.mxu0
    %430 = vmatprep.mubr.f32.mxu0 0.0
    %431 = vmatmul.mubr.f32.gmra.mxu0 %v341
    %v432 = vpop.f32.mrf.mxu0
    %v433 = vadd.f32 %v335, %v432
    %v434 = vpop.f32.mrf.mxu0
    %435 = vmatprep.mubr.f32.mxu0 0.0
    %436 = vmatmul.mubr.f32.gmra.mxu0 %v344
    %v437 = vpop.f32.mrf.mxu0
    %v438 = vadd.f32 %v335, %v437
    %v439 = vpop.f32.mrf.mxu0
    %440 = vmatprep.mubr.f32.mxu0 0.0
    %441 = vmatmul.mubr.f32.gmra.mxu0 %v347
    %v442 = vpop.f32.mrf.mxu0
    %v443 = vadd.f32 %v335, %v442
    %v444 = vpop.f32.mrf.mxu0
    %445 = vmatprep.mubr.f32.mxu0 0.0
    %446 = vmatmul.mubr.f32.gmra.mxu0 %v350
    %v447 = vpop.f32.mrf.mxu0
    %v448 = vadd.f32 %v335, %v447
    %v449 = vpop.f32.mrf.mxu0
    %450 = vmatprep.mubr.f32.mxu0 0.0
    %451 = vmatmul.mubr.f32.gmra.mxu0 %v353
    %v452 = vpop.f32.mrf.mxu0
    %v453 = vadd.f32 %v335, %v452
    %v454 = vpop.f32.mrf.mxu0
    %455 = vmatprep.mubr.f32.mxu0 0.0
    %456 = vmatmul.mubr.f32.gmra.mxu0 %v356
    %v457 = vpop.f32.mrf.mxu0
    %v458 = vadd.f32 %v335, %v457
    %v459 = vpop.f32.mrf.mxu0
    %460 = vmatprep.mubr.f32.mxu0 0.0
    %461 = vmatmul.mubr.f32.gmra.mxu0 %v359
    %v462 = vpop.f32.mrf.mxu0
    %v463 = vadd.f32 %v335, %v462
    %v464 = vpop.f32.mrf.mxu0
    %465 = vdwg.mxu0
    %v466 = vld [vmem:[%s7] sm:$0xff]
    %v467 = vld [vmem:[%s7 + $0x8] sm:$0xff]
    %v468 = vld [vmem:[%s7 + $0x10] sm:$0xff]
    %v469 = vld [vmem:[%s7 + $0x18] sm:$0xff]
    %v471 = vsel %vm204, 0.0, 0
    %473 = vmatprep.subr.mxu0 0.0
    %474 = vmatpush1.msra.mxu0 0.0
    %475 = vmatprep.subr.mxu0 0.0
    %476 = vmatpush1.msra.mxu0 0.0
    %477 = vmatprep.subr.mxu0 0.0
    %478 = vmatpush1.msra.mxu0 0.0
    %479 = vmatprep.subr.mxu0 0.0
    %480 = vmatpush1.msra.mxu0 0.0
    %481 = vmatprep.subr.mxu0 0.0
    %482 = vmatpush1.msra.mxu0 0.0
    %483 = vmatprep.subr.mxu0 0.0
    %484 = vmatpush1.msra.mxu0 0.0
    %485 = vmatprep.subr.mxu0 0.0
    %486 = vmatpush1.msra.mxu0 0.0
    %487 = vmatprep.subr.mxu0 0.0
    %488 = vmatpush1.msra.mxu0 0.0
    %489 = vmatprep.subr.mxu0 0.0
    %490 = vmatpush1.msra.mxu0 0.0
    %491 = vmatprep.subr.mxu0 0.0
    %492 = vmatpush1.msra.mxu0 0.0
    %493 = vmatprep.subr.mxu0 0.0
    %494 = vmatpush1.msra.mxu0 0.0
    %495 = vmatprep.subr.mxu0 0.0
    %496 = vmatpush1.msra.mxu0 0.0
    %497 = vmatprep.subr.mxu0 0.0
    %498 = vmatpush1.msra.mxu0 %v469
    %499 = vmatprep.subr.mxu0 0.0
    %500 = vmatpush1.msra.mxu0 %v468
    %501 = vmatprep.subr.mxu0 0.0
    %502 = vmatpush1.msra.mxu0 %v467
    %503 = vmatprep.subr.mxu0 0.0
    %504 = vmatpush1.msra.mxu0 %v466
    %505 = vmatprep.subr.mxu0 0.0
    %506 = vmatpush2.msra.mxu0 0.0
    %507 = vmatprep.subr.mxu0 0.0
    %508 = vmatpush2.msra.mxu0 0.0
    %509 = vmatprep.subr.mxu0 0.0
    %510 = vmatpush2.msra.mxu0 0.0
    %511 = vmatprep.subr.mxu0 0.0
    %512 = vmatpush2.msra.mxu0 0.0
    %513 = vmatprep.subr.mxu0 0.0
    %514 = vmatpush2.msra.mxu0 0.0
    %515 = vmatprep.subr.mxu0 0.0
    %516 = vmatpush2.msra.mxu0 0.0
    %517 = vmatprep.subr.mxu0 0.0
    %518 = vmatpush2.msra.mxu0 0.0
    %519 = vmatprep.subr.mxu0 0.0
    %520 = vmatpush2.msra.mxu0 0.0
    %521 = vmatprep.subr.mxu0 0.0
    %522 = vmatpush2.msra.mxu0 0.0
    %523 = vmatprep.subr.mxu0 0.0
    %524 = vmatpush2.msra.mxu0 0.0
    %525 = vmatprep.subr.mxu0 0.0
    %526 = vmatpush2.msra.mxu0 0.0
    %527 = vmatprep.subr.mxu0 0.0
    %528 = vmatpush2.msra.mxu0 0.0
    %529 = vmatprep.subr.mxu0 0.0
    %530 = vmatpush2.msra.mxu0 0.0
    %531 = vmatprep.subr.mxu0 0.0
    %532 = vmatpush2.msra.mxu0 0.0
    %533 = vmatprep.subr.mxu0 0.0
    %534 = vmatpush2.msra.mxu0 0.0
    %535 = vmatprep.subr.mxu0 0.0
    %536 = vmatpush2.msra.mxu0 0.0
    %537 = vmatprep.mubr.f32.mxu0 0.0
    %538 = vmatmul.mubr.f32.gmra.mxu0 %v471
    %v539 = vpop.f32.mrf.mxu0
    %v540 = vadd.f32 0.0, %v539
    %v541 = vpop.f32.mrf.mxu0
    %542 = vdwg.mxu0
    %v543 = vadd.f32 %v428, %v540
    %v544 = vxor.u32 %v543, 2147483648
    %v545 = vmul.f32 %v544, 1.442695
    %v546 = vpow.pop %v545
    %v547 = vadd.f32 %v546, 1.0
    %v548 = vrcp.pop %v547
    %v549 = vmul.f32 1.0, %v548
    %v550 = vtanh.pop %v543
    %v551 = vmul.f32 %v549, 0.0
    %553 = vrot.lane.b32.xlu0 %v550, 32
    %v554 = vpop.permute.xlu0 %553
    %v556 = vmul.f32 %v549, %v554
    %558 = vrot.lane.b32.xlu0 %v556, 32
    %v559 = vpop.permute.xlu0 %558
    %v561 = vadd.f32 %v551, %v559
    %v562 = vtanh.pop %v561
    %564 = vrot.lane.b32.xlu0 %v562, 32
    %v565 = vpop.permute.xlu0 %564
    %v567 = vmul.f32 %v549, %v565
    %569 = vrot.lane.b32.xlu0 %v567, 64
    %v570 = vpop.permute.xlu0 %569
    %v571 = vsel %vm204, %v570, 0
    %573 = vmatprep.subr.mxu0 0.0
    %574 = vmatpush1.msra.mxu0 0.0
    %575 = vmatprep.subr.mxu0 0.0
    %576 = vmatpush1.msra.mxu0 0.0
    %577 = vmatprep.subr.mxu0 0.0
    %578 = vmatpush1.msra.mxu0 0.0
    %579 = vmatprep.subr.mxu0 0.0
    %580 = vmatpush1.msra.mxu0 0.0
    %581 = vmatprep.subr.mxu0 0.0
    %582 = vmatpush1.msra.mxu0 0.0
    %583 = vmatprep.subr.mxu0 0.0
    %584 = vmatpush1.msra.mxu0 0.0
    %585 = vmatprep.subr.mxu0 0.0
    %586 = vmatpush1.msra.mxu0 0.0
    %587 = vmatprep.subr.mxu0 0.0
    %588 = vmatpush1.msra.mxu0 0.0
    %589 = vmatprep.subr.mxu0 0.0
    %590 = vmatpush1.msra.mxu0 0.0
    %591 = vmatprep.subr.mxu0 0.0
    %592 = vmatpush1.msra.mxu0 0.0
    %593 = vmatprep.subr.mxu0 0.0
    %594 = vmatpush1.msra.mxu0 0.0
    %595 = vmatprep.subr.mxu0 0.0
    %596 = vmatpush1.msra.mxu0 0.0
    %597 = vmatprep.subr.mxu0 0.0
    %598 = vmatpush1.msra.mxu0 %v469
    %599 = vmatprep.subr.mxu0 0.0
    %600 = vmatpush1.msra.mxu0 %v468
    %601 = vmatprep.subr.mxu0 0.0
    %602 = vmatpush1.msra.mxu0 %v467
    %603 = vmatprep.subr.mxu0 0.0
    %604 = vmatpush1.msra.mxu0 %v466
    %605 = vmatprep.subr.mxu0 0.0
    %606 = vmatpush2.msra.mxu0 0.0
    %607 = vmatprep.subr.mxu0 0.0
    %608 = vmatpush2.msra.mxu0 0.0
    %609 = vmatprep.subr.mxu0 0.0
    %610 = vmatpush2.msra.mxu0 0.0
    %611 = vmatprep.subr.mxu0 0.0
    %612 = vmatpush2.msra.mxu0 0.0
    %613 = vmatprep.subr.mxu0 0.0
    %614 = vmatpush2.msra.mxu0 0.0
    %615 = vmatprep.subr.mxu0 0.0
    %616 = vmatpush2.msra.mxu0 0.0
    %617 = vmatprep.subr.mxu0 0.0
    %618 = vmatpush2.msra.mxu0 0.0
    %619 = vmatprep.subr.mxu0 0.0
    %620 = vmatpush2.msra.mxu0 0.0
    %621 = vmatprep.subr.mxu0 0.0
    %622 = vmatpush2.msra.mxu0 0.0
    %623 = vmatprep.subr.mxu0 0.0
    %624 = vmatpush2.msra.mxu0 0.0
    %625 = vmatprep.subr.mxu0 0.0
    %626 = vmatpush2.msra.mxu0 0.0
    %627 = vmatprep.subr.mxu0 0.0
    %628 = vmatpush2.msra.mxu0 0.0
    %629 = vmatprep.subr.mxu0 0.0
    %630 = vmatpush2.msra.mxu0 0.0
    %631 = vmatprep.subr.mxu0 0.0
    %632 = vmatpush2.msra.mxu0 0.0
    %633 = vmatprep.subr.mxu0 0.0
    %634 = vmatpush2.msra.mxu0 0.0
    %635 = vmatprep.subr.mxu0 0.0
    %636 = vmatpush2.msra.mxu0 0.0
    %637 = vmatprep.mubr.f32.mxu0 0.0
    %638 = vmatmul.mubr.f32.gmra.mxu0 %v571
    %v639 = vpop.f32.mrf.mxu0
    %v640 = vadd.f32 0.0, %v639
    %v641 = vpop.f32.mrf.mxu0
    %642 = vdwg.mxu0
    %v643 = vadd.f32 %v433, %v640
    %v644 = vxor.u32 %v643, 2147483648
    %v645 = vmul.f32 %v644, 1.442695
    %v646 = vpow.pop %v645
    %v647 = vadd.f32 %v646, 1.0
    %v648 = vrcp.pop %v647
    %v649 = vmul.f32 1.0, %v648
    %v650 = vtanh.pop %v643
    %v651 = vmul.f32 %v649, %v561
    %653 = vrot.lane.b32.xlu0 %v650, 32
    %v654 = vpop.permute.xlu0 %653
    %v656 = vmul.f32 %v649, %v654
    %658 = vrot.lane.b32.xlu0 %v656, 32
    %v659 = vpop.permute.xlu0 %658
    %v661 = vadd.f32 %v651, %v659
    %v662 = vtanh.pop %v661
    %664 = vrot.lane.b32.xlu0 %v662, 32
    %v665 = vpop.permute.xlu0 %664
    %v667 = vmul.f32 %v649, %v665
    %669 = vrot.lane.b32.xlu0 %v667, 64
    %v670 = vpop.permute.xlu0 %669
    %v671 = vsel %vm204, %v670, 0
    %673 = vmatprep.subr.mxu0 0.0
    %674 = vmatpush1.msra.mxu0 0.0
    %675 = vmatprep.subr.mxu0 0.0
    %676 = vmatpush1.msra.mxu0 0.0
    %677 = vmatprep.subr.mxu0 0.0
    %678 = vmatpush1.msra.mxu0 0.0
    %679 = vmatprep.subr.mxu0 0.0
    %680 = vmatpush1.msra.mxu0 0.0
    %681 = vmatprep.subr.mxu0 0.0
    %682 = vmatpush1.msra.mxu0 0.0
    %683 = vmatprep.subr.mxu0 0.0
    %684 = vmatpush1.msra.mxu0 0.0
    %685 = vmatprep.subr.mxu0 0.0
    %686 = vmatpush1.msra.mxu0 0.0
    %687 = vmatprep.subr.mxu0 0.0
    %688 = vmatpush1.msra.mxu0 0.0
    %689 = vmatprep.subr.mxu0 0.0
    %690 = vmatpush1.msra.mxu0 0.0
    %691 = vmatprep.subr.mxu0 0.0
    %692 = vmatpush1.msra.mxu0 0.0
    %693 = vmatprep.subr.mxu0 0.0
    %694 = vmatpush1.msra.mxu0 0.0
    %695 = vmatprep.subr.mxu0 0.0
    %696 = vmatpush1.msra.mxu0 0.0
    %697 = vmatprep.subr.mxu0 0.0
    %698 = vmatpush1.msra.mxu0 %v469
    %699 = vmatprep.subr.mxu0 0.0
    %700 = vmatpush1.msra.mxu0 %v468
    %701 = vmatprep.subr.mxu0 0.0
    %702 = vmatpush1.msra.mxu0 %v467
    %703 = vmatprep.subr.mxu0 0.0
    %704 = vmatpush1.msra.mxu0 %v466
    %705 = vmatprep.subr.mxu0 0.0
    %706 = vmatpush2.msra.mxu0 0.0
    %707 = vmatprep.subr.mxu0 0.0
    %708 = vmatpush2.msra.mxu0 0.0
    %709 = vmatprep.subr.mxu0 0.0
    %710 = vmatpush2.msra.mxu0 0.0
    %711 = vmatprep.subr.mxu0 0.0
    %712 = vmatpush2.msra.mxu0 0.0
    %713 = vmatprep.subr.mxu0 0.0
    %714 = vmatpush2.msra.mxu0 0.0
    %715 = vmatprep.subr.mxu0 0.0
    %716 = vmatpush2.msra.mxu0 0.0
    %717 = vmatprep.subr.mxu0 0.0
    %718 = vmatpush2.msra.mxu0 0.0
    %719 = vmatprep.subr.mxu0 0.0
    %720 = vmatpush2.msra.mxu0 0.0
    %721 = vmatprep.subr.mxu0 0.0
    %722 = vmatpush2.msra.mxu0 0.0
    %723 = vmatprep.subr.mxu0 0.0
    %724 = vmatpush2.msra.mxu0 0.0
    %725 = vmatprep.subr.mxu0 0.0
    %726 = vmatpush2.msra.mxu0 0.0
    %727 = vmatprep.subr.mxu0 0.0
    %728 = vmatpush2.msra.mxu0 0.0
    %729 = vmatprep.subr.mxu0 0.0
    %730 = vmatpush2.msra.mxu0 0.0
    %731 = vmatprep.subr.mxu0 0.0
    %732 = vmatpush2.msra.mxu0 0.0
    %733 = vmatprep.subr.mxu0 0.0
    %734 = vmatpush2.msra.mxu0 0.0
    %735 = vmatprep.subr.mxu0 0.0
    %736 = vmatpush2.msra.mxu0 0.0
    %737 = vmatprep.mubr.f32.mxu0 0.0
    %738 = vmatmul.mubr.f32.gmra.mxu0 %v671
    %v739 = vpop.f32.mrf.mxu0
    %v740 = vadd.f32 0.0, %v739
    %v741 = vpop.f32.mrf.mxu0
    %742 = vdwg.mxu0
    %v743 = vadd.f32 %v438, %v740
    %v744 = vxor.u32 %v743, 2147483648
    %v745 = vmul.f32 %v744, 1.442695
    %v746 = vpow.pop %v745
    %v747 = vadd.f32 %v746, 1.0
    %v748 = vrcp.pop %v747
    %v749 = vmul.f32 1.0, %v748
    %v750 = vtanh.pop %v743
    %v751 = vmul.f32 %v749, %v661
    %753 = vrot.lane.b32.xlu0 %v750, 32
    %v754 = vpop.permute.xlu0 %753
    %v756 = vmul.f32 %v749, %v754
    %758 = vrot.lane.b32.xlu0 %v756, 32
    %v759 = vpop.permute.xlu0 %758
    %v761 = vadd.f32 %v751, %v759
    %v762 = vtanh.pop %v761
    %764 = vrot.lane.b32.xlu0 %v762, 32
    %v765 = vpop.permute.xlu0 %764
    %v767 = vmul.f32 %v749, %v765
    %769 = vrot.lane.b32.xlu0 %v767, 64
    %v770 = vpop.permute.xlu0 %769
    %v771 = vsel %vm204, %v770, 0
    %773 = vmatprep.subr.mxu0 0.0
    %774 = vmatpush1.msra.mxu0 0.0
    %775 = vmatprep.subr.mxu0 0.0
    %776 = vmatpush1.msra.mxu0 0.0
    %777 = vmatprep.subr.mxu0 0.0
    %778 = vmatpush1.msra.mxu0 0.0
    %779 = vmatprep.subr.mxu0 0.0
    %780 = vmatpush1.msra.mxu0 0.0
    %781 = vmatprep.subr.mxu0 0.0
    %782 = vmatpush1.msra.mxu0 0.0
    %783 = vmatprep.subr.mxu0 0.0
    %784 = vmatpush1.msra.mxu0 0.0
    %785 = vmatprep.subr.mxu0 0.0
    %786 = vmatpush1.msra.mxu0 0.0
    %787 = vmatprep.subr.mxu0 0.0
    %788 = vmatpush1.msra.mxu0 0.0
    %789 = vmatprep.subr.mxu0 0.0
    %790 = vmatpush1.msra.mxu0 0.0
    %791 = vmatprep.subr.mxu0 0.0
    %792 = vmatpush1.msra.mxu0 0.0
    %793 = vmatprep.subr.mxu0 0.0
    %794 = vmatpush1.msra.mxu0 0.0
    %795 = vmatprep.subr.mxu0 0.0
    %796 = vmatpush1.msra.mxu0 0.0
    %797 = vmatprep.subr.mxu0 0.0
    %798 = vmatpush1.msra.mxu0 %v469
    %799 = vmatprep.subr.mxu0 0.0
    %800 = vmatpush1.msra.mxu0 %v468
    %801 = vmatprep.subr.mxu0 0.0
    %802 = vmatpush1.msra.mxu0 %v467
    %803 = vmatprep.subr.mxu0 0.0
    %804 = vmatpush1.msra.mxu0 %v466
    %805 = vmatprep.subr.mxu0 0.0
    %806 = vmatpush2.msra.mxu0 0.0
    %807 = vmatprep.subr.mxu0 0.0
    %808 = vmatpush2.msra.mxu0 0.0
    %809 = vmatprep.subr.mxu0 0.0
    %810 = vmatpush2.msra.mxu0 0.0
    %811 = vmatprep.subr.mxu0 0.0
    %812 = vmatpush2.msra.mxu0 0.0
    %813 = vmatprep.subr.mxu0 0.0
    %814 = vmatpush2.msra.mxu0 0.0
    %815 = vmatprep.subr.mxu0 0.0
    %816 = vmatpush2.msra.mxu0 0.0
    %817 = vmatprep.subr.mxu0 0.0
    %818 = vmatpush2.msra.mxu0 0.0
    %819 = vmatprep.subr.mxu0 0.0
    %820 = vmatpush2.msra.mxu0 0.0
    %821 = vmatprep.subr.mxu0 0.0
    %822 = vmatpush2.msra.mxu0 0.0
    %823 = vmatprep.subr.mxu0 0.0
    %824 = vmatpush2.msra.mxu0 0.0
    %825 = vmatprep.subr.mxu0 0.0
    %826 = vmatpush2.msra.mxu0 0.0
    %827 = vmatprep.subr.mxu0 0.0
    %828 = vmatpush2.msra.mxu0 0.0
    %829 = vmatprep.subr.mxu0 0.0
    %830 = vmatpush2.msra.mxu0 0.0
    %831 = vmatprep.subr.mxu0 0.0
    %832 = vmatpush2.msra.mxu0 0.0
    %833 = vmatprep.subr.mxu0 0.0
    %834 = vmatpush2.msra.mxu0 0.0
    %835 = vmatprep.subr.mxu0 0.0
    %836 = vmatpush2.msra.mxu0 0.0
    %837 = vmatprep.mubr.f32.mxu0 0.0
    %838 = vmatmul.mubr.f32.gmra.mxu0 %v771
    %v839 = vpop.f32.mrf.mxu0
    %v840 = vadd.f32 0.0, %v839
    %v841 = vpop.f32.mrf.mxu0
    %842 = vdwg.mxu0
    %v843 = vadd.f32 %v443, %v840
    %v844 = vxor.u32 %v843, 2147483648
    %v845 = vmul.f32 %v844, 1.442695
    %v846 = vpow.pop %v845
    %v847 = vadd.f32 %v846, 1.0
    %v848 = vrcp.pop %v847
    %v849 = vmul.f32 1.0, %v848
    %v850 = vtanh.pop %v843
    %v851 = vmul.f32 %v849, %v761
    %853 = vrot.lane.b32.xlu0 %v850, 32
    %v854 = vpop.permute.xlu0 %853
    %v856 = vmul.f32 %v849, %v854
    %858 = vrot.lane.b32.xlu0 %v856, 32
    %v859 = vpop.permute.xlu0 %858
    %v861 = vadd.f32 %v851, %v859
    %v862 = vtanh.pop %v861
    %864 = vrot.lane.b32.xlu0 %v862, 32
    %v865 = vpop.permute.xlu0 %864
    %v867 = vmul.f32 %v849, %v865
    %869 = vrot.lane.b32.xlu0 %v867, 64
    %v870 = vpop.permute.xlu0 %869
    %v871 = vsel %vm204, %v870, 0
    %873 = vmatprep.subr.mxu0 0.0
    %874 = vmatpush1.msra.mxu0 0.0
    %875 = vmatprep.subr.mxu0 0.0
    %876 = vmatpush1.msra.mxu0 0.0
    %877 = vmatprep.subr.mxu0 0.0
    %878 = vmatpush1.msra.mxu0 0.0
    %879 = vmatprep.subr.mxu0 0.0
    %880 = vmatpush1.msra.mxu0 0.0
    %881 = vmatprep.subr.mxu0 0.0
    %882 = vmatpush1.msra.mxu0 0.0
    %883 = vmatprep.subr.mxu0 0.0
    %884 = vmatpush1.msra.mxu0 0.0
    %885 = vmatprep.subr.mxu0 0.0
    %886 = vmatpush1.msra.mxu0 0.0
    %887 = vmatprep.subr.mxu0 0.0
    %888 = vmatpush1.msra.mxu0 0.0
    %889 = vmatprep.subr.mxu0 0.0
    %890 = vmatpush1.msra.mxu0 0.0
    %891 = vmatprep.subr.mxu0 0.0
    %892 = vmatpush1.msra.mxu0 0.0
    %893 = vmatprep.subr.mxu0 0.0
    %894 = vmatpush1.msra.mxu0 0.0
    %895 = vmatprep.subr.mxu0 0.0
    %896 = vmatpush1.msra.mxu0 0.0
    %897 = vmatprep.subr.mxu0 0.0
    %898 = vmatpush1.msra.mxu0 %v469
    %899 = vmatprep.subr.mxu0 0.0
    %900 = vmatpush1.msra.mxu0 %v468
    %901 = vmatprep.subr.mxu0 0.0
    %902 = vmatpush1.msra.mxu0 %v467
    %903 = vmatprep.subr.mxu0 0.0
    %904 = vmatpush1.msra.mxu0 %v466
    %905 = vmatprep.subr.mxu0 0.0
    %906 = vmatpush2.msra.mxu0 0.0
    %907 = vmatprep.subr.mxu0 0.0
    %908 = vmatpush2.msra.mxu0 0.0
    %909 = vmatprep.subr.mxu0 0.0
    %910 = vmatpush2.msra.mxu0 0.0
    %911 = vmatprep.subr.mxu0 0.0
    %912 = vmatpush2.msra.mxu0 0.0
    %913 = vmatprep.subr.mxu0 0.0
    %914 = vmatpush2.msra.mxu0 0.0
    %915 = vmatprep.subr.mxu0 0.0
    %916 = vmatpush2.msra.mxu0 0.0
    %917 = vmatprep.subr.mxu0 0.0
    %918 = vmatpush2.msra.mxu0 0.0
    %919 = vmatprep.subr.mxu0 0.0
    %920 = vmatpush2.msra.mxu0 0.0
    %921 = vmatprep.subr.mxu0 0.0
    %922 = vmatpush2.msra.mxu0 0.0
    %923 = vmatprep.subr.mxu0 0.0
    %924 = vmatpush2.msra.mxu0 0.0
    %925 = vmatprep.subr.mxu0 0.0
    %926 = vmatpush2.msra.mxu0 0.0
    %927 = vmatprep.subr.mxu0 0.0
    %928 = vmatpush2.msra.mxu0 0.0
    %929 = vmatprep.subr.mxu0 0.0
    %930 = vmatpush2.msra.mxu0 0.0
    %931 = vmatprep.subr.mxu0 0.0
    %932 = vmatpush2.msra.mxu0 0.0
    %933 = vmatprep.subr.mxu0 0.0
    %934 = vmatpush2.msra.mxu0 0.0
    %935 = vmatprep.subr.mxu0 0.0
    %936 = vmatpush2.msra.mxu0 0.0
    %937 = vmatprep.mubr.f32.mxu0 0.0
    %938 = vmatmul.mubr.f32.gmra.mxu0 %v871
    %v939 = vpop.f32.mrf.mxu0
    %v940 = vadd.f32 0.0, %v939
    %v941 = vpop.f32.mrf.mxu0
    %942 = vdwg.mxu0
    %v943 = vadd.f32 %v448, %v940
    %v944 = vxor.u32 %v943, 2147483648
    %v945 = vmul.f32 %v944, 1.442695
    %v946 = vpow.pop %v945
    %v947 = vadd.f32 %v946, 1.0
    %v948 = vrcp.pop %v947
    %v949 = vmul.f32 1.0, %v948
    %v950 = vtanh.pop %v943
    %v951 = vmul.f32 %v949, %v861
    %953 = vrot.lane.b32.xlu0 %v950, 32
    %v954 = vpop.permute.xlu0 %953
    %v956 = vmul.f32 %v949, %v954
    %958 = vrot.lane.b32.xlu0 %v956, 32
    %v959 = vpop.permute.xlu0 %958
    %v961 = vadd.f32 %v951, %v959
    %v962 = vtanh.pop %v961
    %964 = vrot.lane.b32.xlu0 %v962, 32
    %v965 = vpop.permute.xlu0 %964
    %v967 = vmul.f32 %v949, %v965
    %969 = vrot.lane.b32.xlu0 %v967, 64
    %v970 = vpop.permute.xlu0 %969
    %v971 = vsel %vm204, %v970, 0
    %973 = vmatprep.subr.mxu0 0.0
    %974 = vmatpush1.msra.mxu0 0.0
    %975 = vmatprep.subr.mxu0 0.0
    %976 = vmatpush1.msra.mxu0 0.0
    %977 = vmatprep.subr.mxu0 0.0
    %978 = vmatpush1.msra.mxu0 0.0
    %979 = vmatprep.subr.mxu0 0.0
    %980 = vmatpush1.msra.mxu0 0.0
    %981 = vmatprep.subr.mxu0 0.0
    %982 = vmatpush1.msra.mxu0 0.0
    %983 = vmatprep.subr.mxu0 0.0
    %984 = vmatpush1.msra.mxu0 0.0
    %985 = vmatprep.subr.mxu0 0.0
    %986 = vmatpush1.msra.mxu0 0.0
    %987 = vmatprep.subr.mxu0 0.0
    %988 = vmatpush1.msra.mxu0 0.0
    %989 = vmatprep.subr.mxu0 0.0
    %990 = vmatpush1.msra.mxu0 0.0
    %991 = vmatprep.subr.mxu0 0.0
    %992 = vmatpush1.msra.mxu0 0.0
    %993 = vmatprep.subr.mxu0 0.0
    %994 = vmatpush1.msra.mxu0 0.0
    %995 = vmatprep.subr.mxu0 0.0
    %996 = vmatpush1.msra.mxu0 0.0
    %997 = vmatprep.subr.mxu0 0.0
    %998 = vmatpush1.msra.mxu0 %v469
    %999 = vmatprep.subr.mxu0 0.0
    %1000 = vmatpush1.msra.mxu0 %v468
    %1001 = vmatprep.subr.mxu0 0.0
    %1002 = vmatpush1.msra.mxu0 %v467
    %1003 = vmatprep.subr.mxu0 0.0
    %1004 = vmatpush1.msra.mxu0 %v466
    %1005 = vmatprep.subr.mxu0 0.0
    %1006 = vmatpush2.msra.mxu0 0.0
    %1007 = vmatprep.subr.mxu0 0.0
    %1008 = vmatpush2.msra.mxu0 0.0
    %1009 = vmatprep.subr.mxu0 0.0
    %1010 = vmatpush2.msra.mxu0 0.0
    %1011 = vmatprep.subr.mxu0 0.0
    %1012 = vmatpush2.msra.mxu0 0.0
    %1013 = vmatprep.subr.mxu0 0.0
    %1014 = vmatpush2.msra.mxu0 0.0
    %1015 = vmatprep.subr.mxu0 0.0
    %1016 = vmatpush2.msra.mxu0 0.0
    %1017 = vmatprep.subr.mxu0 0.0
    %1018 = vmatpush2.msra.mxu0 0.0
    %1019 = vmatprep.subr.mxu0 0.0
    %1020 = vmatpush2.msra.mxu0 0.0
    %1021 = vmatprep.subr.mxu0 0.0
    %1022 = vmatpush2.msra.mxu0 0.0
    %1023 = vmatprep.subr.mxu0 0.0
    %1024 = vmatpush2.msra.mxu0 0.0
    %1025 = vmatprep.subr.mxu0 0.0
    %1026 = vmatpush2.msra.mxu0 0.0
    %1027 = vmatprep.subr.mxu0 0.0
    %1028 = vmatpush2.msra.mxu0 0.0
    %1029 = vmatprep.subr.mxu0 0.0
    %1030 = vmatpush2.msra.mxu0 0.0
    %1031 = vmatprep.subr.mxu0 0.0
    %1032 = vmatpush2.msra.mxu0 0.0
    %1033 = vmatprep.subr.mxu0 0.0
    %1034 = vmatpush2.msra.mxu0 0.0
    %1035 = vmatprep.subr.mxu0 0.0
    %1036 = vmatpush2.msra.mxu0 0.0
    %1037 = vmatprep.mubr.f32.mxu0 0.0
    %1038 = vmatmul.mubr.f32.gmra.mxu0 %v971
    %v1039 = vpop.f32.mrf.mxu0
    %v1040 = vadd.f32 0.0, %v1039
    %v1041 = vpop.f32.mrf.mxu0
    %1042 = vdwg.mxu0
    %v1043 = vadd.f32 %v453, %v1040
    %v1044 = vxor.u32 %v1043, 2147483648
    %v1045 = vmul.f32 %v1044, 1.442695
    %v1046 = vpow.pop %v1045
    %v1047 = vadd.f32 %v1046, 1.0
    %v1048 = vrcp.pop %v1047
    %v1049 = vmul.f32 1.0, %v1048
    %v1050 = vtanh.pop %v1043
    %v1051 = vmul.f32 %v1049, %v961
    %1053 = vrot.lane.b32.xlu0 %v1050, 32
    %v1054 = vpop.permute.xlu0 %1053
    %v1056 = vmul.f32 %v1049, %v1054
    %1058 = vrot.lane.b32.xlu0 %v1056, 32
    %v1059 = vpop.permute.xlu0 %1058
    %v1061 = vadd.f32 %v1051, %v1059
    %v1062 = vtanh.pop %v1061
    %1064 = vrot.lane.b32.xlu0 %v1062, 32
    %v1065 = vpop.permute.xlu0 %1064
    %v1067 = vmul.f32 %v1049, %v1065
    %1069 = vrot.lane.b32.xlu0 %v1067, 64
    %v1070 = vpop.permute.xlu0 %1069
    %v1071 = vsel %vm204, %v1070, 0
    %1073 = vmatprep.subr.mxu0 0.0
    %1074 = vmatpush1.msra.mxu0 0.0
    %1075 = vmatprep.subr.mxu0 0.0
    %1076 = vmatpush1.msra.mxu0 0.0
    %1077 = vmatprep.subr.mxu0 0.0
    %1078 = vmatpush1.msra.mxu0 0.0
    %1079 = vmatprep.subr.mxu0 0.0
    %1080 = vmatpush1.msra.mxu0 0.0
    %1081 = vmatprep.subr.mxu0 0.0
    %1082 = vmatpush1.msra.mxu0 0.0
    %1083 = vmatprep.subr.mxu0 0.0
    %1084 = vmatpush1.msra.mxu0 0.0
    %1085 = vmatprep.subr.mxu0 0.0
    %1086 = vmatpush1.msra.mxu0 0.0
    %1087 = vmatprep.subr.mxu0 0.0
    %1088 = vmatpush1.msra.mxu0 0.0
    %1089 = vmatprep.subr.mxu0 0.0
    %1090 = vmatpush1.msra.mxu0 0.0
    %1091 = vmatprep.subr.mxu0 0.0
    %1092 = vmatpush1.msra.mxu0 0.0
    %1093 = vmatprep.subr.mxu0 0.0
    %1094 = vmatpush1.msra.mxu0 0.0
    %1095 = vmatprep.subr.mxu0 0.0
    %1096 = vmatpush1.msra.mxu0 0.0
    %1097 = vmatprep.subr.mxu0 0.0
    %1098 = vmatpush1.msra.mxu0 %v469
    %1099 = vmatprep.subr.mxu0 0.0
    %1100 = vmatpush1.msra.mxu0 %v468
    %1101 = vmatprep.subr.mxu0 0.0
    %1102 = vmatpush1.msra.mxu0 %v467
    %1103 = vmatprep.subr.mxu0 0.0
    %1104 = vmatpush1.msra.mxu0 %v466
    %1105 = vmatprep.subr.mxu0 0.0
    %1106 = vmatpush2.msra.mxu0 0.0
    %1107 = vmatprep.subr.mxu0 0.0
    %1108 = vmatpush2.msra.mxu0 0.0
    %1109 = vmatprep.subr.mxu0 0.0
    %1110 = vmatpush2.msra.mxu0 0.0
    %1111 = vmatprep.subr.mxu0 0.0
    %1112 = vmatpush2.msra.mxu0 0.0
    %1113 = vmatprep.subr.mxu0 0.0
    %1114 = vmatpush2.msra.mxu0 0.0
    %1115 = vmatprep.subr.mxu0 0.0
    %1116 = vmatpush2.msra.mxu0 0.0
    %1117 = vmatprep.subr.mxu0 0.0
    %1118 = vmatpush2.msra.mxu0 0.0
    %1119 = vmatprep.subr.mxu0 0.0
    %1120 = vmatpush2.msra.mxu0 0.0
    %1121 = vmatprep.subr.mxu0 0.0
    %1122 = vmatpush2.msra.mxu0 0.0
    %1123 = vmatprep.subr.mxu0 0.0
    %1124 = vmatpush2.msra.mxu0 0.0
    %1125 = vmatprep.subr.mxu0 0.0
    %1126 = vmatpush2.msra.mxu0 0.0
    %1127 = vmatprep.subr.mxu0 0.0
    %1128 = vmatpush2.msra.mxu0 0.0
    %1129 = vmatprep.subr.mxu0 0.0
    %1130 = vmatpush2.msra.mxu0 0.0
    %1131 = vmatprep.subr.mxu0 0.0
    %1132 = vmatpush2.msra.mxu0 0.0
    %1133 = vmatprep.subr.mxu0 0.0
    %1134 = vmatpush2.msra.mxu0 0.0
    %1135 = vmatprep.subr.mxu0 0.0
    %1136 = vmatpush2.msra.mxu0 0.0
    %1137 = vmatprep.mubr.f32.mxu0 0.0
    %1138 = vmatmul.mubr.f32.gmra.mxu0 %v1071
    %v1139 = vpop.f32.mrf.mxu0
    %v1140 = vadd.f32 0.0, %v1139
    %v1141 = vpop.f32.mrf.mxu0
    %1142 = vdwg.mxu0
    %v1143 = vadd.f32 %v458, %v1140
    %v1144 = vxor.u32 %v1143, 2147483648
    %v1145 = vmul.f32 %v1144, 1.442695
    %v1146 = vpow.pop %v1145
    %v1147 = vadd.f32 %v1146, 1.0
    %v1148 = vrcp.pop %v1147
    %v1149 = vmul.f32 1.0, %v1148
    %v1150 = vtanh.pop %v1143
    %v1151 = vmul.f32 %v1149, %v1061
    %1153 = vrot.lane.b32.xlu0 %v1150, 32
    %v1154 = vpop.permute.xlu0 %1153
    %v1156 = vmul.f32 %v1149, %v1154
    %1158 = vrot.lane.b32.xlu0 %v1156, 32
    %v1159 = vpop.permute.xlu0 %1158
    %v1161 = vadd.f32 %v1151, %v1159
    %v1162 = vtanh.pop %v1161
    %1164 = vrot.lane.b32.xlu0 %v1162, 32
    %v1165 = vpop.permute.xlu0 %1164
    %v1167 = vmul.f32 %v1149, %v1165
    %1169 = vrot.lane.b32.xlu0 %v1167, 64
    %v1170 = vpop.permute.xlu0 %1169
    %v1171 = vsel %vm204, %v1170, 0
    %1173 = vmatprep.subr.mxu0 0.0
    %1174 = vmatpush1.msra.mxu0 0.0
    %1175 = vmatprep.subr.mxu0 0.0
    %1176 = vmatpush1.msra.mxu0 0.0
    %1177 = vmatprep.subr.mxu0 0.0
    %1178 = vmatpush1.msra.mxu0 0.0
    %1179 = vmatprep.subr.mxu0 0.0
    %1180 = vmatpush1.msra.mxu0 0.0
    %1181 = vmatprep.subr.mxu0 0.0
    %1182 = vmatpush1.msra.mxu0 0.0
    %1183 = vmatprep.subr.mxu0 0.0
    %1184 = vmatpush1.msra.mxu0 0.0
    %1185 = vmatprep.subr.mxu0 0.0
    %1186 = vmatpush1.msra.mxu0 0.0
    %1187 = vmatprep.subr.mxu0 0.0
    %1188 = vmatpush1.msra.mxu0 0.0
    %1189 = vmatprep.subr.mxu0 0.0
    %1190 = vmatpush1.msra.mxu0 0.0
    %1191 = vmatprep.subr.mxu0 0.0
    %1192 = vmatpush1.msra.mxu0 0.0
    %1193 = vmatprep.subr.mxu0 0.0
    %1194 = vmatpush1.msra.mxu0 0.0
    %1195 = vmatprep.subr.mxu0 0.0
    %1196 = vmatpush1.msra.mxu0 0.0
    %1197 = vmatprep.subr.mxu0 0.0
    %1198 = vmatpush1.msra.mxu0 %v469
    %1199 = vmatprep.subr.mxu0 0.0
    %1200 = vmatpush1.msra.mxu0 %v468
    %1201 = vmatprep.subr.mxu0 0.0
    %1202 = vmatpush1.msra.mxu0 %v467
    %1203 = vmatprep.subr.mxu0 0.0
    %1204 = vmatpush1.msra.mxu0 %v466
    %1205 = vmatprep.subr.mxu0 0.0
    %1206 = vmatpush2.msra.mxu0 0.0
    %1207 = vmatprep.subr.mxu0 0.0
    %1208 = vmatpush2.msra.mxu0 0.0
    %1209 = vmatprep.subr.mxu0 0.0
    %1210 = vmatpush2.msra.mxu0 0.0
    %1211 = vmatprep.subr.mxu0 0.0
    %1212 = vmatpush2.msra.mxu0 0.0
    %1213 = vmatprep.subr.mxu0 0.0
    %1214 = vmatpush2.msra.mxu0 0.0
    %1215 = vmatprep.subr.mxu0 0.0
    %1216 = vmatpush2.msra.mxu0 0.0
    %1217 = vmatprep.subr.mxu0 0.0
    %1218 = vmatpush2.msra.mxu0 0.0
    %1219 = vmatprep.subr.mxu0 0.0
    %1220 = vmatpush2.msra.mxu0 0.0
    %1221 = vmatprep.subr.mxu0 0.0
    %1222 = vmatpush2.msra.mxu0 0.0
    %1223 = vmatprep.subr.mxu0 0.0
    %1224 = vmatpush2.msra.mxu0 0.0
    %1225 = vmatprep.subr.mxu0 0.0
    %1226 = vmatpush2.msra.mxu0 0.0
    %1227 = vmatprep.subr.mxu0 0.0
    %1228 = vmatpush2.msra.mxu0 0.0
    %1229 = vmatprep.subr.mxu0 0.0
    %1230 = vmatpush2.msra.mxu0 0.0
    %1231 = vmatprep.subr.mxu0 0.0
    %1232 = vmatpush2.msra.mxu0 0.0
    %1233 = vmatprep.subr.mxu0 0.0
    %1234 = vmatpush2.msra.mxu0 0.0
    %1235 = vmatprep.subr.mxu0 0.0
    %1236 = vmatpush2.msra.mxu0 0.0
    %1237 = vmatprep.mubr.f32.mxu0 0.0
    %1238 = vmatmul.mubr.f32.gmra.mxu0 %v1171
    %v1239 = vpop.f32.mrf.mxu0
    %v1240 = vadd.f32 0.0, %v1239
    %v1241 = vpop.f32.mrf.mxu0
    %1242 = vdwg.mxu0
    %v1243 = vadd.f32 %v463, %v1240
    %v1244 = vxor.u32 %v1243, 2147483648
    %v1245 = vmul.f32 %v1244, 1.442695
    %v1246 = vpow.pop %v1245
    %v1247 = vadd.f32 %v1246, 1.0
    %v1248 = vrcp.pop %v1247
    %v1249 = vmul.f32 1.0, %v1248
    %v1250 = vtanh.pop %v1243
    %v1251 = vmul.f32 %v1249, %v1161
    %1253 = vrot.lane.b32.xlu0 %v1250, 32
    %v1254 = vpop.permute.xlu0 %1253
    %v1256 = vmul.f32 %v1249, %v1254
    %1258 = vrot.lane.b32.xlu0 %v1256, 32
    %v1259 = vpop.permute.xlu0 %1258
    %v1261 = vadd.f32 %v1251, %v1259
    %v1262 = vtanh.pop %v1261
    %1264 = vrot.lane.b32.xlu0 %v1262, 32
    %v1265 = vpop.permute.xlu0 %1264
    %v1267 = vmul.f32 %v1249, %v1265
    %v1268 = vld [vmem:[%s8] sm:$0xff]
    %v1269 = vld [vmem:[%s8 + $0x8] sm:$0xff]
    %v1270 = vld [vmem:[%s8 + $0x10] sm:$0xff]
    %v1271 = vld [vmem:[%s8 + $0x18] sm:$0xff]
    %v1272 = vld [vmem:[%s9] sm:$0x1]
    %v1274 = vlaneseq
    %v1275 = vshrl.u32 %v1274, 7
    %v1276 = vsub.s32 0, %v1275
    %v1277 = vrot.slane %v1272, %v1276
    %1280 = vrot.lane.b32.xlu0 %v1267, 64
    %v1281 = vpop.permute.xlu0 %1280
    %v1282 = vsel %vm204, %v1281, 0
    %1284 = vmatprep.subr.mxu0 0.0
    %1285 = vmatpush1.msra.mxu0 0.0
    %1286 = vmatprep.subr.mxu0 0.0
    %1287 = vmatpush1.msra.mxu0 0.0
    %1288 = vmatprep.subr.mxu0 0.0
    %1289 = vmatpush1.msra.mxu0 0.0
    %1290 = vmatprep.subr.mxu0 0.0
    %1291 = vmatpush1.msra.mxu0 0.0
    %1292 = vmatprep.subr.mxu0 0.0
    %1293 = vmatpush1.msra.mxu0 0.0
    %1294 = vmatprep.subr.mxu0 0.0
    %1295 = vmatpush1.msra.mxu0 0.0
    %1296 = vmatprep.subr.mxu0 0.0
    %1297 = vmatpush1.msra.mxu0 0.0
    %1298 = vmatprep.subr.mxu0 0.0
    %1299 = vmatpush1.msra.mxu0 0.0
    %1300 = vmatprep.subr.mxu0 0.0
    %1301 = vmatpush1.msra.mxu0 0.0
    %1302 = vmatprep.subr.mxu0 0.0
    %1303 = vmatpush1.msra.mxu0 0.0
    %1304 = vmatprep.subr.mxu0 0.0
    %1305 = vmatpush1.msra.mxu0 0.0
    %1306 = vmatprep.subr.mxu0 0.0
    %1307 = vmatpush1.msra.mxu0 0.0
    %1308 = vmatprep.subr.mxu0 0.0
    %1309 = vmatpush1.msra.mxu0 %v1271
    %1310 = vmatprep.subr.mxu0 0.0
    %1311 = vmatpush1.msra.mxu0 %v1270
    %1312 = vmatprep.subr.mxu0 0.0
    %1313 = vmatpush1.msra.mxu0 %v1269
    %1314 = vmatprep.subr.mxu0 0.0
    %1315 = vmatpush1.msra.mxu0 %v1268
    %1316 = vmatprep.subr.mxu0 0.0
    %1317 = vmatpush2.msra.mxu0 0.0
    %1318 = vmatprep.subr.mxu0 0.0
    %1319 = vmatpush2.msra.mxu0 0.0
    %1320 = vmatprep.subr.mxu0 0.0
    %1321 = vmatpush2.msra.mxu0 0.0
    %1322 = vmatprep.subr.mxu0 0.0
    %1323 = vmatpush2.msra.mxu0 0.0
    %1324 = vmatprep.subr.mxu0 0.0
    %1325 = vmatpush2.msra.mxu0 0.0
    %1326 = vmatprep.subr.mxu0 0.0
    %1327 = vmatpush2.msra.mxu0 0.0
    %1328 = vmatprep.subr.mxu0 0.0
    %1329 = vmatpush2.msra.mxu0 0.0
    %1330 = vmatprep.subr.mxu0 0.0
    %1331 = vmatpush2.msra.mxu0 0.0
    %1332 = vmatprep.subr.mxu0 0.0
    %1333 = vmatpush2.msra.mxu0 0.0
    %1334 = vmatprep.subr.mxu0 0.0
    %1335 = vmatpush2.msra.mxu0 0.0
    %1336 = vmatprep.subr.mxu0 0.0
    %1337 = vmatpush2.msra.mxu0 0.0
    %1338 = vmatprep.subr.mxu0 0.0
    %1339 = vmatpush2.msra.mxu0 0.0
    %1340 = vmatprep.subr.mxu0 0.0
    %1341 = vmatpush2.msra.mxu0 0.0
    %1342 = vmatprep.subr.mxu0 0.0
    %1343 = vmatpush2.msra.mxu0 0.0
    %1344 = vmatprep.subr.mxu0 0.0
    %1345 = vmatpush2.msra.mxu0 0.0
    %1346 = vmatprep.subr.mxu0 0.0
    %1347 = vmatpush2.msra.mxu0 0.0
    %1348 = vmatprep.mubr.f32.mxu0 0.0
    %1349 = vmatmul.mubr.f32.gmra.mxu0 %v571
    %v1350 = vpop.f32.mrf.mxu0
    %v1351 = vadd.f32 %v1277, %v1350
    %v1352 = vpop.f32.mrf.mxu0
    %1353 = vmatprep.mubr.f32.mxu0 0.0
    %1354 = vmatmul.mubr.f32.gmra.mxu0 %v671
    %v1355 = vpop.f32.mrf.mxu0
    %v1356 = vadd.f32 %v1277, %v1355
    %v1357 = vpop.f32.mrf.mxu0
    %1358 = vmatprep.mubr.f32.mxu0 0.0
    %1359 = vmatmul.mubr.f32.gmra.mxu0 %v771
    %v1360 = vpop.f32.mrf.mxu0
    %v1361 = vadd.f32 %v1277, %v1360
    %v1362 = vpop.f32.mrf.mxu0
    %1363 = vmatprep.mubr.f32.mxu0 0.0
    %1364 = vmatmul.mubr.f32.gmra.mxu0 %v871
    %v1365 = vpop.f32.mrf.mxu0
    %v1366 = vadd.f32 %v1277, %v1365
    %v1367 = vpop.f32.mrf.mxu0
    %1368 = vmatprep.mubr.f32.mxu0 0.0
    %1369 = vmatmul.mubr.f32.gmra.mxu0 %v971
    %v1370 = vpop.f32.mrf.mxu0
    %v1371 = vadd.f32 %v1277, %v1370
    %v1372 = vpop.f32.mrf.mxu0
    %1373 = vmatprep.mubr.f32.mxu0 0.0
    %1374 = vmatmul.mubr.f32.gmra.mxu0 %v1071
    %v1375 = vpop.f32.mrf.mxu0
    %v1376 = vadd.f32 %v1277, %v1375
    %v1377 = vpop.f32.mrf.mxu0
    %1378 = vmatprep.mubr.f32.mxu0 0.0
    %1379 = vmatmul.mubr.f32.gmra.mxu0 %v1171
    %v1380 = vpop.f32.mrf.mxu0
    %v1381 = vadd.f32 %v1277, %v1380
    %v1382 = vpop.f32.mrf.mxu0
    %1383 = vmatprep.mubr.f32.mxu0 0.0
    %1384 = vmatmul.mubr.f32.gmra.mxu0 %v1282
    %v1385 = vpop.f32.mrf.mxu0
    %v1386 = vadd.f32 %v1277, %v1385
    %v1387 = vpop.f32.mrf.mxu0
    %1388 = vdwg.mxu0
    %v1389 = vsel %vm204, %v1351, -inf
    %1390 = vmax.xlane.f32.xlu0 %v1389
    %v1391 = vpop.xlane.xlu0 %1390
    %v1392 = vsel %vm204, %v1356, -inf
    %1393 = vmax.xlane.f32.xlu0 %v1392
    %v1394 = vpop.xlane.xlu0 %1393
    %v1395 = vsel %vm204, %v1361, -inf
    %1396 = vmax.xlane.f32.xlu0 %v1395
    %v1397 = vpop.xlane.xlu0 %1396
    %v1398 = vsel %vm204, %v1366, -inf
    %1399 = vmax.xlane.f32.xlu0 %v1398
    %v1400 = vpop.xlane.xlu0 %1399
    %v1401 = vsel %vm204, %v1371, -inf
    %1402 = vmax.xlane.f32.xlu0 %v1401
    %v1403 = vpop.xlane.xlu0 %1402
    %v1404 = vsel %vm204, %v1376, -inf
    %1405 = vmax.xlane.f32.xlu0 %v1404
    %v1406 = vpop.xlane.xlu0 %1405
    %v1407 = vsel %vm204, %v1381, -inf
    %1408 = vmax.xlane.f32.xlu0 %v1407
    %v1409 = vpop.xlane.xlu0 %1408
    %v1410 = vsel %vm204, %v1386, -inf
    %1411 = vmax.xlane.f32.xlu0 %v1410
    %v1412 = vpop.xlane.xlu0 %1411
    %v1413 = vsub.f32 %v1351, %v1391
    %v1414 = vsub.f32 %v1356, %v1394
    %v1415 = vsub.f32 %v1361, %v1397
    %v1416 = vsub.f32 %v1366, %v1400
    %v1417 = vsub.f32 %v1371, %v1403
    %v1418 = vsub.f32 %v1376, %v1406
    %v1419 = vsub.f32 %v1381, %v1409
    %v1420 = vsub.f32 %v1386, %v1412
    %v1421 = vmul.f32 %v1413, 1.442695
    %v1422 = vpow.pop %v1421
    %v1423 = vmul.f32 %v1414, 1.442695
    %v1424 = vpow.pop %v1423
    %v1425 = vmul.f32 %v1415, 1.442695
    %v1426 = vpow.pop %v1425
    %v1427 = vmul.f32 %v1416, 1.442695
    %v1428 = vpow.pop %v1427
    %v1429 = vmul.f32 %v1417, 1.442695
    %v1430 = vpow.pop %v1429
    %v1431 = vmul.f32 %v1418, 1.442695
    %v1432 = vpow.pop %v1431
    %v1433 = vmul.f32 %v1419, 1.442695
    %v1434 = vpow.pop %v1433
    %v1435 = vmul.f32 %v1420, 1.442695
    %v1436 = vpow.pop %v1435
    %v1437 = vsel %vm204, %v1422, 0.0
    %1438 = vadd.xlane.f32.xlu0 %v1437
    %v1439 = vpop.xlane.xlu0 %1438
    %v1440 = vsel %vm204, %v1424, 0.0
    %1441 = vadd.xlane.f32.xlu0 %v1440
    %v1442 = vpop.xlane.xlu0 %1441
    %v1443 = vsel %vm204, %v1426, 0.0
    %1444 = vadd.xlane.f32.xlu0 %v1443
    %v1445 = vpop.xlane.xlu0 %1444
    %v1446 = vsel %vm204, %v1428, 0.0
    %1447 = vadd.xlane.f32.xlu0 %v1446
    %v1448 = vpop.xlane.xlu0 %1447
    %v1449 = vsel %vm204, %v1430, 0.0
    %1450 = vadd.xlane.f32.xlu0 %v1449
    %v1451 = vpop.xlane.xlu0 %1450
    %v1452 = vsel %vm204, %v1432, 0.0
    %1453 = vadd.xlane.f32.xlu0 %v1452
    %v1454 = vpop.xlane.xlu0 %1453
    %v1455 = vsel %vm204, %v1434, 0.0
    %1456 = vadd.xlane.f32.xlu0 %v1455
    %v1457 = vpop.xlane.xlu0 %1456
    %v1458 = vsel %vm204, %v1436, 0.0
    %1459 = vadd.xlane.f32.xlu0 %v1458
    %v1460 = vpop.xlane.xlu0 %1459
    %v1461 = vlog2.pop %v1439
    %v1462 = vmul.f32 %v1461, 0.6931472
    %v1463 = vlog2.pop %v1442
    %v1464 = vmul.f32 %v1463, 0.6931472
    %v1465 = vlog2.pop %v1445
    %v1466 = vmul.f32 %v1465, 0.6931472
    %v1467 = vlog2.pop %v1448
    %v1468 = vmul.f32 %v1467, 0.6931472
    %v1469 = vlog2.pop %v1451
    %v1470 = vmul.f32 %v1469, 0.6931472
    %v1471 = vlog2.pop %v1454
    %v1472 = vmul.f32 %v1471, 0.6931472
    %v1473 = vlog2.pop %v1457
    %v1474 = vmul.f32 %v1473, 0.6931472
    %v1475 = vlog2.pop %v1460
    %v1476 = vmul.f32 %v1475, 0.6931472
    %v1477 = vadd.f32 %v1462, %v1391
    %v1478 = vadd.f32 %v1464, %v1394
    %v1479 = vadd.f32 %v1466, %v1397
    %v1480 = vadd.f32 %v1468, %v1400
    %v1481 = vadd.f32 %v1470, %v1403
    %v1482 = vadd.f32 %v1472, %v1406
    %v1483 = vadd.f32 %v1474, %v1409
    %v1484 = vadd.f32 %v1476, %v1412
    %v1485 = vsub.f32 %v1351, %v1477
    %v1486 = vsub.f32 %v1356, %v1478
    %v1487 = vsub.f32 %v1361, %v1479
    %v1488 = vsub.f32 %v1366, %v1480
    %v1489 = vsub.f32 %v1371, %v1481
    %v1490 = vsub.f32 %v1376, %v1482
    %v1491 = vsub.f32 %v1381, %v1483
    %v1492 = vsub.f32 %v1386, %v1484
    %1493 = vst.msk [vmem:[%s10] sm:$0xff] %vm204, %v1485
    %1494 = vst.msk [vmem:[%s10 + $0x8] sm:$0xff] %vm204, %v1486
    %1495 = vst.msk [vmem:[%s10 + $0x10] sm:$0xff] %vm204, %v1487
    %1496 = vst.msk [vmem:[%s10 + $0x18] sm:$0xff] %vm204, %v1488
    %1497 = vst.msk [vmem:[%s10 + $0x20] sm:$0xff] %vm204, %v1489
    %1498 = vst.msk [vmem:[%s10 + $0x28] sm:$0xff] %vm204, %v1490
    %1499 = vst.msk [vmem:[%s10 + $0x30] sm:$0xff] %vm204, %v1491
    %1500 = vst.msk [vmem:[%s10 + $0x38] sm:$0xff] %vm204, %v1492
    // Predicated region
    $region50: #{tpu_custom_call.1} parent=1 // pred_check
      _
    $region51: #{tpu_custom_call.1} parent=1 // pred_check_branch
      %1502 = sbr.rel (0) target = $region53
    $region52: #{tpu_custom_call.1} parent=1 // pred_region
      _
    $region53: #{tpu_custom_call.1} parent=1 // pred_fallthru
      _
    // Predicated region
    $region54: #{tpu_custom_call.1} parent=1 // pred_check
      _
    $region55: #{tpu_custom_call.1} parent=1 // pred_check_branch
      %1504 = sbr.rel (0) target = $region57
    $region56: #{tpu_custom_call.1} parent=1 // pred_region
      _
    $region57: #{tpu_custom_call.1} parent=1 // pred_fallthru
      _
    %1505 = vsyncpa [#allocation3], 1
    %1506 = vsyncpa [#allocation5], 1

</llo_original>
